<compile_context>
chip_gen: v6e
topology: v6e:2x2x1
jax: 0.10.0
libtpu: 0.0.40
codegen_flags: <defaults>
</compile_context>

<pallas_src>
import math

import jax
import jax.numpy as jnp
from jax.experimental import pallas as pl
from jax.experimental.pallas import tpu as pltpu

STATE_IN = 64
ACTION_IN = 300
STATE_REP = STATE_IN // 2          # 32
ACTION_REP = ACTION_IN // 3        # 100
REP = STATE_REP + ACTION_REP       # 132
HID = 32


def _round_up(x, m):
    return ((x + m - 1) // m) * m


def _cdiv(a, b):
    return (a + b - 1) // b


def _disc_kernel(s_ref, a_ref, w1s_ref, w1a_ref, w2_ref, w3_ref, w4t_ref,
                 bias_ref, out_ref):
    def lrelu(t):
        return jnp.where(t > 0, t, 0.2 * t)

    cdt = w1s_ref.dtype  # compute dtype for MXU operands (bf16)

    # Unpack the coalesced f32 bias array (static slices of a resident VMEM ref).
    b1 = bias_ref[0:1, :]            # (1, 132) = [bias_state(32), bias_action(100)]
    b2 = bias_ref[1:2, 0:HID]        # (1, 32)
    b3 = bias_ref[2:3, 0:HID]        # (1, 32)
    b4 = bias_ref[3:4, 0:1]          # (1, 1)

    # Layer 1: zero-padded block-column weights make
    #   s @ W1s + a @ W1a == concat(s @ Ws, a @ Wa)        -> (TB, 132), f32 acc.
    s = s_ref[...].astype(cdt)
    a = a_ref[...].astype(cdt)
    h = (jnp.dot(s, w1s_ref[...], preferred_element_type=jnp.float32)
         + jnp.dot(a, w1a_ref[...], preferred_element_type=jnp.float32)
         + b1)
    h = lrelu(h)                     # LeakyReLU on the concatenation
    # Dropout = identity (inference)

    # Layer 2: (TB,132) @ (132,32)
    h = lrelu(jnp.dot(h.astype(cdt), w2_ref[...],
                      preferred_element_type=jnp.float32) + b2)
    # Layer 3: (TB,32) @ (32,32)
    h = lrelu(jnp.dot(h.astype(cdt), w3_ref[...],
                      preferred_element_type=jnp.float32) + b3)

    # Final Linear(32,1) as a transposed contraction so logits come out lane-major:
    # (1,32) x (TB,32)^T -> (1, TB).
    logit = jnp.einsum("ok,nk->on", w4t_ref[...], h.astype(cdt),
                       preferred_element_type=jnp.float32) + b4

    # Numerically stable sigmoid: only exp of non-positive values.
    z = jnp.exp(-jnp.abs(logit))
    inv = 1.0 / (1.0 + z)
    validity = jnp.where(logit >= 0, inv, z * inv)
    validity = jnp.clip(validity, 1e-7, 1.0 - 1e-7)

    # Lane-dense, full-width (8, TB) store (validity broadcast over sublanes).
    out_ref[...] = jnp.broadcast_to(validity, out_ref.shape).astype(out_ref.dtype)


def woz_discriminator_forward(state, action, params, *, batch_tile=2048):
    """state: (B, 64), action: (B, 300) float -> (B, 1) f32 in (1e-7, 1-1e-7)."""
    B = state.shape[0]

    # Batch tile: multiple of 128 (lane-dense output).  Clamp so that whenever
    # B > 128 the grid has >= 2 tiles (keeps both v7x TensorCores busy).
    TB = min(batch_tile, _round_up(_cdiv(B, 2), 128))
    TB = max(128, _round_up(TB, 128))
    num_tiles = _cdiv(B, TB)

    out = pl.pallas_call(
        _disc_kernel,
        out_shape=jax.ShapeDtypeStruct((8, B), jnp.float32),
        grid=(num_tiles,),
        in_specs=[
            pl.BlockSpec((TB, STATE_IN), lambda i: (i, 0)),      # state: batch-tiled
            pl.BlockSpec((TB, ACTION_IN), lambda i: (i, 0)),     # action: batch-tiled
            pl.BlockSpec((STATE_IN, REP), lambda i: (0, 0)),     # W1s: resident
            pl.BlockSpec((ACTION_IN, REP), lambda i: (0, 0)),    # W1a: resident
            pl.BlockSpec((REP, HID), lambda i: (0, 0)),          # W2: resident
            pl.BlockSpec((HID, HID), lambda i: (0, 0)),          # W3: resident
            pl.BlockSpec((1, HID), lambda i: (0, 0)),            # w4^T: resident
            pl.BlockSpec((8, REP), lambda i: (0, 0)),            # packed biases (f32)
        ],
        out_specs=pl.BlockSpec((8, TB), lambda i: (0, i)),
        compiler_params=pltpu.CompilerParams(
            dimension_semantics=("parallel",),
            vmem_limit_bytes=32 << 20,
        ),
    )(state, action, params["w1s"], params["w1a"], params["w2"], params["w3"],
      params["w4t"], params["bias_pack"])

    # Row 0 holds the validities along lanes; contiguous slice, no strided gather.
    return out[0, :][:, None]


def init_params(key):
    """PyTorch-style nn.Linear init: U(-1/sqrt(fan_in), 1/sqrt(fan_in)).

    Weights stored transposed vs torch (shape (in, out)) so forward is x @ W + b.
    """
    keys = jax.random.split(key, 10)

    def linear(kw, kb, fan_in, fan_out):
        bound = 1.0 / math.sqrt(fan_in)
        w = jax.random.uniform(kw, (fan_in, fan_out), jnp.float32, -bound, bound)
        b = jax.random.uniform(kb, (fan_out,), jnp.float32, -bound, bound)
        return w, b

    ws, bs = linear(keys[0], keys[1], STATE_IN, STATE_REP)      # Linear(64, 32)
    wa, ba = linear(keys[2], keys[3], ACTION_IN, ACTION_REP)    # Linear(300, 100)
    w2, b2 = linear(keys[4], keys[5], REP, HID)                 # Linear(132, 32)
    w3, b3 = linear(keys[6], keys[7], HID, HID)                 # Linear(32, 32)
    w4, b4 = linear(keys[8], keys[9], HID, 1)                   # Linear(32, 1)
    return dict(ws=ws, bs=bs, wa=wa, ba=ba, w2=w2, b2=b2, w3=w3, b3=b3,
                w4=w4, b4=b4)


def pack_params(p, compute_dtype=jnp.bfloat16):
    """Coalesce per-layer params into the kernel's weight/bias operands (bf16)."""
    # Zero-padded block-column layer-1 weights so s@W1s + a@W1a == concat(s@Ws, a@Wa).
    w1s = jnp.zeros((STATE_IN, REP), compute_dtype)
    w1s = w1s.at[:, :STATE_REP].set(p["ws"].astype(compute_dtype))
    w1a = jnp.zeros((ACTION_IN, REP), compute_dtype)
    w1a = w1a.at[:, STATE_REP:].set(p["wa"].astype(compute_dtype))

    bias = jnp.zeros((8, REP), jnp.float32)
    bias = bias.at[0, :STATE_REP].set(p["bs"])
    bias = bias.at[0, STATE_REP:].set(p["ba"])
    bias = bias.at[1, :HID].set(p["b2"])
    bias = bias.at[2, :HID].set(p["b3"])
    bias = bias.at[3, 0].set(p["b4"][0])

    return dict(w1s=w1s, w1a=w1a,
                w2=p["w2"].astype(compute_dtype),
                w3=p["w3"].astype(compute_dtype),
                w4t=p["w4"].T.astype(compute_dtype),
                bias_pack=bias)


def _reference(state, action, p):
    lrelu = lambda t: jnp.where(t > 0, t, 0.2 * t)
    s1 = state @ p["ws"] + p["bs"]
    a1 = action @ p["wa"] + p["ba"]
    sa = jnp.concatenate([s1, a1], axis=1)
    h = lrelu(sa) @ p["w2"] + p["b2"]
    h = lrelu(h) @ p["w3"] + p["b3"]
    logit = lrelu(h) @ p["w4"] + p["b4"]
    return jnp.clip(jax.nn.sigmoid(logit), 1e-7, 1.0 - 1e-7)


if __name__ == "__main__":
    key = jax.random.PRNGKey(0)
    k_p, k_s, k_a = jax.random.split(key, 3)

    # Small, but large enough that the tile clamp yields a 2-tile grid with a
    # partial last block (TB = 256, grid = 2), exercising pipelining + edge masking.
    B = 300
    raw = init_params(k_p)
    packed = pack_params(raw)
    state = jax.random.normal(k_s, (B, STATE_IN), jnp.float32)
    action = jax.random.normal(k_a, (B, ACTION_IN), jnp.float32)

    out = woz_discriminator_forward(state, action, packed)
    out = jax.block_until_ready(out)

    ref = _reference(state, action, raw)
    assert out.shape == (B, 1)
    err = float(jnp.max(jnp.abs(out - ref)))
    # bf16 matmul path vs f32 reference: probabilities agree to ~1e-3 level.
    assert err < 1e-2, f"max abs diff {err}"
    print("KERNEL_OK")
</pallas_src>

<mosaic_0001>
module attributes {stable_mosaic.version = 11 : i64} {
  func.func @_disc_kernel(%arg0: i32, %arg1: memref<256x64xf32, #tpu.memory_space<vmem>>, %arg2: memref<256x300xf32, #tpu.memory_space<vmem>>, %arg3: memref<64x132xbf16, #tpu.memory_space<vmem>>, %arg4: memref<300x132xbf16, #tpu.memory_space<vmem>>, %arg5: memref<132x32xbf16, #tpu.memory_space<vmem>>, %arg6: memref<32x32xbf16, #tpu.memory_space<vmem>>, %arg7: memref<1x32xbf16, #tpu.memory_space<vmem>>, %arg8: memref<8x132xf32, #tpu.memory_space<vmem>>, %arg9: memref<8x256xf32, #tpu.memory_space<vmem>>) attributes {dimension_semantics = [#tpu.dimension_semantics<parallel>], iteration_bounds = array<i64: 2>, scalar_prefetch = 0 : i64, scratch_operands = 0 : i64, tpu.core_type = #tpu.core_type<tc>, window_params = [{transform_indices = @transform_0, window_bounds = array<i64: 256, 64>}, {transform_indices = @transform_1, window_bounds = array<i64: 256, 300>}, {pipeline_mode = #tpu.pipeline_mode<synchronous>, transform_indices = @transform_2, window_bounds = array<i64: 64, 132>}, {pipeline_mode = #tpu.pipeline_mode<synchronous>, transform_indices = @transform_3, window_bounds = array<i64: 300, 132>}, {pipeline_mode = #tpu.pipeline_mode<synchronous>, transform_indices = @transform_4, window_bounds = array<i64: 132, 32>}, {pipeline_mode = #tpu.pipeline_mode<synchronous>, transform_indices = @transform_5, window_bounds = array<i64: 32, 32>}, {pipeline_mode = #tpu.pipeline_mode<synchronous>, transform_indices = @transform_6, window_bounds = array<i64: 1, 32>}, {pipeline_mode = #tpu.pipeline_mode<synchronous>, transform_indices = @transform_7, window_bounds = array<i64: 8, 132>}, {transform_indices = @transform_8, window_bounds = array<i64: 8, 256>}]} {
    %c0 = arith.constant 0 : index
    %c0_0 = arith.constant 0 : index
    %0 = vector.load %arg8[%c0, %c0_0] : memref<8x132xf32, #tpu.memory_space<vmem>>, vector<1x132xf32>
    %c1 = arith.constant 1 : index
    %c0_1 = arith.constant 0 : index
    %1 = vector.load %arg8[%c1, %c0_1] : memref<8x132xf32, #tpu.memory_space<vmem>>, vector<1x32xf32>
    %c2 = arith.constant 2 : index
    %c0_2 = arith.constant 0 : index
    %2 = vector.load %arg8[%c2, %c0_2] : memref<8x132xf32, #tpu.memory_space<vmem>>, vector<1x32xf32>
    %c3 = arith.constant 3 : index
    %c0_3 = arith.constant 0 : index
    %3 = vector.load %arg8[%c3, %c0_3] : memref<8x132xf32, #tpu.memory_space<vmem>>, vector<1x1xf32>
    %c0_4 = arith.constant 0 : index
    %c0_5 = arith.constant 0 : index
    %4 = vector.load %arg1[%c0_4, %c0_5] : memref<256x64xf32, #tpu.memory_space<vmem>>, vector<256x64xf32>
    %5 = arith.truncf %4 : vector<256x64xf32> to vector<256x64xbf16>
    %c0_6 = arith.constant 0 : index
    %c0_7 = arith.constant 0 : index
    %6 = vector.load %arg2[%c0_6, %c0_7] : memref<256x300xf32, #tpu.memory_space<vmem>>, vector<256x300xf32>
    %7 = arith.truncf %6 : vector<256x300xf32> to vector<256x300xbf16>
    %c0_8 = arith.constant 0 : index
    %c0_9 = arith.constant 0 : index
    %8 = vector.load %arg3[%c0_8, %c0_9] : memref<64x132xbf16, #tpu.memory_space<vmem>>, vector<64x132xbf16>
    %cst = arith.constant dense<0.000000e+00> : vector<256x132xf32>
    %9 = tpu.matmul %5, %8, %cst {dimension_numbers = #tpu.dot_dimension_numbers<[1], [0], [0], [1], [0, 0, 1, 1], [], []>} : vector<256x64xbf16>, vector<64x132xbf16>, vector<256x132xf32> -> vector<256x132xf32>
    %c0_10 = arith.constant 0 : index
    %c0_11 = arith.constant 0 : index
    %10 = vector.load %arg4[%c0_10, %c0_11] : memref<300x132xbf16, #tpu.memory_space<vmem>>, vector<300x132xbf16>
    %cst_12 = arith.constant dense<0.000000e+00> : vector<256x132xf32>
    %11 = tpu.matmul %7, %10, %cst_12 {dimension_numbers = #tpu.dot_dimension_numbers<[1], [0], [0], [1], [0, 0, 1, 1], [], []>} : vector<256x300xbf16>, vector<300x132xbf16>, vector<256x132xf32> -> vector<256x132xf32>
    %12 = arith.addf %9, %11 : vector<256x132xf32>
    %13 = vector.broadcast %0 : vector<1x132xf32> to vector<256x132xf32>
    %14 = arith.addf %12, %13 : vector<256x132xf32>
    %cst_13 = arith.constant 0.000000e+00 : f32
    %15 = vector.broadcast %cst_13 : f32 to vector<256x132xf32>
    %16 = arith.cmpf ogt, %14, %15 : vector<256x132xf32>
    %cst_14 = arith.constant 2.000000e-01 : f32
    %17 = vector.broadcast %cst_14 : f32 to vector<256x132xf32>
    %18 = arith.mulf %17, %14 : vector<256x132xf32>
    %19 = arith.select %16, %14, %18 : vector<256x132xi1>, vector<256x132xf32>
    %20 = arith.truncf %19 : vector<256x132xf32> to vector<256x132xbf16>
    %c0_15 = arith.constant 0 : index
    %c0_16 = arith.constant 0 : index
    %21 = vector.load %arg5[%c0_15, %c0_16] : memref<132x32xbf16, #tpu.memory_space<vmem>>, vector<132x32xbf16>
    %cst_17 = arith.constant dense<0.000000e+00> : vector<256x32xf32>
    %22 = tpu.matmul %20, %21, %cst_17 {dimension_numbers = #tpu.dot_dimension_numbers<[1], [0], [0], [1], [0, 0, 1, 1], [], []>} : vector<256x132xbf16>, vector<132x32xbf16>, vector<256x32xf32> -> vector<256x32xf32>
    %23 = vector.broadcast %1 : vector<1x32xf32> to vector<256x32xf32>
    %24 = arith.addf %22, %23 : vector<256x32xf32>
    %cst_18 = arith.constant 0.000000e+00 : f32
    %25 = vector.broadcast %cst_18 : f32 to vector<256x32xf32>
    %26 = arith.cmpf ogt, %24, %25 : vector<256x32xf32>
    %cst_19 = arith.constant 2.000000e-01 : f32
    %27 = vector.broadcast %cst_19 : f32 to vector<256x32xf32>
    %28 = arith.mulf %27, %24 : vector<256x32xf32>
    %29 = arith.select %26, %24, %28 : vector<256x32xi1>, vector<256x32xf32>
    %30 = arith.truncf %29 : vector<256x32xf32> to vector<256x32xbf16>
    %c0_20 = arith.constant 0 : index
    %c0_21 = arith.constant 0 : index
    %31 = vector.load %arg6[%c0_20, %c0_21] : memref<32x32xbf16, #tpu.memory_space<vmem>>, vector<32x32xbf16>
    %cst_22 = arith.constant dense<0.000000e+00> : vector<256x32xf32>
    %32 = tpu.matmul %30, %31, %cst_22 {dimension_numbers = #tpu.dot_dimension_numbers<[1], [0], [0], [1], [0, 0, 1, 1], [], []>} : vector<256x32xbf16>, vector<32x32xbf16>, vector<256x32xf32> -> vector<256x32xf32>
    %33 = vector.broadcast %2 : vector<1x32xf32> to vector<256x32xf32>
    %34 = arith.addf %32, %33 : vector<256x32xf32>
    %cst_23 = arith.constant 0.000000e+00 : f32
    %35 = vector.broadcast %cst_23 : f32 to vector<256x32xf32>
    %36 = arith.cmpf ogt, %34, %35 : vector<256x32xf32>
    %cst_24 = arith.constant 2.000000e-01 : f32
    %37 = vector.broadcast %cst_24 : f32 to vector<256x32xf32>
    %38 = arith.mulf %37, %34 : vector<256x32xf32>
    %39 = arith.select %36, %34, %38 : vector<256x32xi1>, vector<256x32xf32>
    %c0_25 = arith.constant 0 : index
    %c0_26 = arith.constant 0 : index
    %40 = vector.load %arg7[%c0_25, %c0_26] : memref<1x32xbf16, #tpu.memory_space<vmem>>, vector<1x32xbf16>
    %41 = arith.truncf %39 : vector<256x32xf32> to vector<256x32xbf16>
    "tpu.trace_start"() <{level = 10 : i32, message = "ok,nk->on"}> : () -> ()
    %cst_27 = arith.constant dense<0.000000e+00> : vector<1x256xf32>
    %42 = tpu.matmul %40, %41, %cst_27 {dimension_numbers = #tpu.dot_dimension_numbers<[1], [1], [0], [0], [0, 0, 1, 0], [], []>} : vector<1x32xbf16>, vector<256x32xbf16>, vector<1x256xf32> -> vector<1x256xf32>
    "tpu.trace_stop"() : () -> ()
    %43 = vector.broadcast %3 : vector<1x1xf32> to vector<1x256xf32>
    %44 = arith.addf %42, %43 : vector<1x256xf32>
    %45 = math.absf %44 : vector<1x256xf32>
    %cst_28 = arith.constant 0.000000e+00 : f32
    %46 = vector.broadcast %cst_28 : f32 to vector<1x256xf32>
    %47 = arith.subf %46, %45 : vector<1x256xf32>
    %48 = math.exp %47 : vector<1x256xf32>
    %cst_29 = arith.constant 1.000000e+00 : f32
    %49 = vector.broadcast %cst_29 : f32 to vector<1x256xf32>
    %50 = arith.addf %49, %48 : vector<1x256xf32>
    %cst_30 = arith.constant 1.000000e+00 : f32
    %51 = vector.broadcast %cst_30 : f32 to vector<1x256xf32>
    %52 = arith.divf %51, %50 : vector<1x256xf32>
    %cst_31 = arith.constant 0.000000e+00 : f32
    %53 = vector.broadcast %cst_31 : f32 to vector<1x256xf32>
    %54 = arith.cmpf oge, %44, %53 : vector<1x256xf32>
    %55 = arith.mulf %48, %52 : vector<1x256xf32>
    %56 = arith.select %54, %52, %55 : vector<1x256xi1>, vector<1x256xf32>
    %cst_32 = arith.constant 1.000000e-07 : f32
    %cst_33 = arith.constant 0.99999988 : f32
    %57 = vector.broadcast %cst_32 : f32 to vector<1x256xf32>
    %58 = arith.maximumf %57, %56 : vector<1x256xf32>
    %59 = vector.broadcast %cst_33 : f32 to vector<1x256xf32>
    %60 = arith.minimumf %59, %58 : vector<1x256xf32>
    %61 = vector.shape_cast %60 : vector<1x256xf32> to vector<1x256xf32>
    %62 = vector.broadcast %61 : vector<1x256xf32> to vector<8x256xf32>
    %c0_34 = arith.constant 0 : index
    %c0_35 = arith.constant 0 : index
    %63 = vector.load %arg9[%c0_34, %c0_35] : memref<8x256xf32, #tpu.memory_space<vmem>>, vector<8x256xf32>
    tpu.vector_store %arg9[%c0_34, %c0_35], %62 {strides = array<i32>} : memref<8x256xf32, #tpu.memory_space<vmem>>, vector<8x256xf32>,
    return
  }
  func.func @transform_0(%arg0: i32) -> (i32, i32) {
    %c0_i32 = arith.constant 0 : i32
    %c0_i32_0 = arith.constant 0 : i32
    return %arg0, %c0_i32 : i32, i32
  }
  func.func @transform_1(%arg0: i32) -> (i32, i32) {
    %c0_i32 = arith.constant 0 : i32
    %c0_i32_0 = arith.constant 0 : i32
    return %arg0, %c0_i32 : i32, i32
  }
  func.func @transform_2(%arg0: i32) -> (i32, i32) {
    %c0_i32 = arith.constant 0 : i32
    %c0_i32_0 = arith.constant 0 : i32
    %c0_i32_1 = arith.constant 0 : i32
    return %c0_i32, %c0_i32_0 : i32, i32
  }
  func.func @transform_3(%arg0: i32) -> (i32, i32) {
    %c0_i32 = arith.constant 0 : i32
    %c0_i32_0 = arith.constant 0 : i32
    %c0_i32_1 = arith.constant 0 : i32
    return %c0_i32, %c0_i32_0 : i32, i32
  }
  func.func @transform_4(%arg0: i32) -> (i32, i32) {
    %c0_i32 = arith.constant 0 : i32
    %c0_i32_0 = arith.constant 0 : i32
    %c0_i32_1 = arith.constant 0 : i32
    return %c0_i32, %c0_i32_0 : i32, i32
  }
  func.func @transform_5(%arg0: i32) -> (i32, i32) {
    %c0_i32 = arith.constant 0 : i32
    %c0_i32_0 = arith.constant 0 : i32
    %c0_i32_1 = arith.constant 0 : i32
    return %c0_i32, %c0_i32_0 : i32, i32
  }
  func.func @transform_6(%arg0: i32) -> (i32, i32) {
    %c0_i32 = arith.constant 0 : i32
    %c0_i32_0 = arith.constant 0 : i32
    %c0_i32_1 = arith.constant 0 : i32
    return %c0_i32, %c0_i32_0 : i32, i32
  }
  func.func @transform_7(%arg0: i32) -> (i32, i32) {
    %c0_i32 = arith.constant 0 : i32
    %c0_i32_0 = arith.constant 0 : i32
    %c0_i32_1 = arith.constant 0 : i32
    return %c0_i32, %c0_i32_0 : i32, i32
  }
  func.func @transform_8(%arg0: i32) -> (i32, i32) {
    %c0_i32 = arith.constant 0 : i32
    %c0_i32_0 = arith.constant 0 : i32
    return %c0_i32, %arg0 : i32, i32
  }
}

</mosaic_0001>

<llo_original>
// kernel: tpu_custom_call.1
$region0: #{tpu_custom_call.1}
  #allocation0 [shape = 'u32[]', space=smem, size = 0x4, offset = 0x4, fixed_abs, tag = 'smem constant byte address 0x4 - core index']
  #allocation1 [shape = 'u32[144,128]{1,0:T(1,128)}', space=vmem, size = 0x12000, scoped, tag = 'internal scratch']
  %s0 = inlined_call_operand.vmem [shape: f32[300,64], index: 0, kind: input, shape index: {}]
  %s1 = inlined_call_operand.vmem [shape: f32[300,300], index: 1, kind: input, shape index: {}]
  %s2 = inlined_call_operand.vmem [shape: bf16[64,132], index: 2, kind: input, shape index: {}]
  %s3 = inlined_call_operand.vmem [shape: bf16[300,132], index: 3, kind: input, shape index: {}]
  %s4 = inlined_call_operand.vmem [shape: bf16[132,32], index: 4, kind: input, shape index: {}]
  %s5 = inlined_call_operand.vmem [shape: bf16[32,32], index: 5, kind: input, shape index: {}]
  %s6 = inlined_call_operand.vmem [shape: bf16[1,32], index: 6, kind: input, shape index: {}]
  %s7 = inlined_call_operand.vmem [shape: f32[8,132], index: 7, kind: input, shape index: {}]
  %s8 = inlined_call_operand.hbm [shape: f32[8,300], index: 8, kind: output, shape index: {}]
  %s9 = sld [smem:[#allocation0]]
  $region65: #{tpu_custom_call.1} parent=0
    _
  %s11 = ssub.s32 1, %s9
  %s12 = scalar_select 0, %s11, %s9
  $region1: #{tpu_custom_call.1} parent=0
    #allocation2 [shape = 'u8[16384]{0}', space=vmem, size = 0x4000, scoped, tag = 'output window, operand 0']
    #allocation3 [shape = 's32[2]{0}', space=sflag, size = 0x8, scoped, tag = 'scoped memory for tpu_custom_call.1']
    %13 = vsyncpa [#allocation3], 0
    %s14 = scalar_lea.sflag [#allocation3], 1
    %15 = vsyncpa %s14, 0
    loop: start=0, step=1, limit=4
    $region2: #{tpu_custom_call.1} parent=1 // loop_pre_header
      _
    $region3: #{tpu_custom_call.1} parent=1 // loop_header
      %s17 = sphi 0, %s21
      %p18 = scmp.ge.s32.totalorder %s17, 4
      %s27 = sphi 0, %s29
      %s30 = sphi 0, %s27
      %s31 = sphi 0, %s30
      %s47 = sphi 0, %s31
      %s53 = sphi 0, %s55
      %s56 = sphi 0, %s53
      %s57 = sphi 0, %s56
      %s73 = sphi 0, %s57
      %s77 = sphi 0, %s77
      %s79 = sphi 0, %s77
      %s80 = sphi 0, %s79
      %s94 = sphi 0, %s80
      %s98 = sphi 0, %s98
      %s100 = sphi 0, %s98
      %s101 = sphi 0, %s100
      %s115 = sphi 0, %s101
      %s119 = sphi 0, %s119
      %s121 = sphi 0, %s119
      %s122 = sphi 0, %s121
      %s136 = sphi 0, %s122
      %s140 = sphi 0, %s140
      %s142 = sphi 0, %s140
      %s143 = sphi 0, %s142
      %s157 = sphi 0, %s143
      %s161 = sphi 0, %s161
      %s163 = sphi 0, %s161
      %s164 = sphi 0, %s163
      %s178 = sphi 0, %s164
      %s182 = sphi 0, %s182
      %s184 = sphi 0, %s182
      %s185 = sphi 0, %s184
      %s199 = sphi 0, %s185
      %s205 = sphi 0, %s207
      %s208 = sphi 0, %s205
      %s209 = sphi 0, %s208
      %s225 = sphi 0, %s209
    $region4: #{tpu_custom_call.1} parent=1 // loop_header_branch
      %20 = sbr.rel (%p18) target = $region8
    $region5: #{tpu_custom_call.1} parent=1 // loop_body
      %s22 = ssub.s32 %s17, 1
      %s23 = ssub.s32 %s17, 2
      %s24 = sadd.s32 %s17, 1
      %s25 = ssub.s32 %s17, %s24
      %p26 = scmp.eq.s32.totalorder %s25, 0
      %s28 = sadd.s32 %s27, 1
      %s29 = scalar_select %p26, %s27, %s28
      %p32 = pneg %p26
      %p33 = scmp.eq.s32.totalorder %s17, 1
      %p34 = por %p32, %p33
      %p35 = scmp.ne.s32.totalorder %s27, %s30
      %p36 = scmp.eq.s32.totalorder %s17, 0
      %p37 = por %p35, %p36
      %p38 = scmp.ne.s32.totalorder %s27, %s30
      %p39 = scmp.eq.s32.totalorder %s22, 1
      %p40 = por %p38, %p39
      %p41 = scmp.ne.s32.totalorder %s30, %s31
      %p42 = scmp.eq.s32.totalorder %s22, 0
      %p43 = por %p41, %p42
      %p44 = scmp.ne.s32.totalorder %s30, %s31
      %p45 = scmp.eq.s32.totalorder %s23, 1
      %p46 = por %p44, %p45
      %p48 = scmp.ne.s32.totalorder %s31, %s47
      %p49 = scmp.eq.s32.totalorder %s23, 0
      %p50 = por %p48, %p49
      %s51 = ssub.s32 %s17, %s24
      %p52 = scmp.eq.s32.totalorder %s51, 0
      %s54 = sadd.s32 %s53, 1
      %s55 = scalar_select %p52, %s53, %s54
      %p58 = pneg %p52
      %p59 = scmp.eq.s32.totalorder %s17, 1
      %p60 = por %p58, %p59
      %p61 = scmp.ne.s32.totalorder %s53, %s56
      %p62 = scmp.eq.s32.totalorder %s17, 0
      %p63 = por %p61, %p62
      %p64 = scmp.ne.s32.totalorder %s53, %s56
      %p65 = scmp.eq.s32.totalorder %s22, 1
      %p66 = por %p64, %p65
      %p67 = scmp.ne.s32.totalorder %s56, %s57
      %p68 = scmp.eq.s32.totalorder %s22, 0
      %p69 = por %p67, %p68
      %p70 = scmp.ne.s32.totalorder %s56, %s57
      %p71 = scmp.eq.s32.totalorder %s23, 1
      %p72 = por %p70, %p71
      %p74 = scmp.ne.s32.totalorder %s57, %s73
      %p75 = scmp.eq.s32.totalorder %s23, 0
      %p76 = por %p74, %p75
      %s78 = sadd.s32 %s77, 1
      %p81 = scmp.eq.s32.totalorder %s17, 1
      %p82 = scmp.ne.s32.totalorder %s77, %s79
      %p83 = scmp.eq.s32.totalorder %s17, 0
      %p84 = por %p82, %p83
      %p85 = scmp.ne.s32.totalorder %s77, %s79
      %p86 = scmp.eq.s32.totalorder %s22, 1
      %p87 = por %p85, %p86
      %p88 = scmp.ne.s32.totalorder %s79, %s80
      %p89 = scmp.eq.s32.totalorder %s22, 0
      %p90 = por %p88, %p89
      %p91 = scmp.ne.s32.totalorder %s79, %s80
      %p92 = scmp.eq.s32.totalorder %s23, 1
      %p93 = por %p91, %p92
      %p95 = scmp.ne.s32.totalorder %s80, %s94
      %p96 = scmp.eq.s32.totalorder %s23, 0
      %p97 = por %p95, %p96
      %s99 = sadd.s32 %s98, 1
      %p102 = scmp.eq.s32.totalorder %s17, 1
      %p103 = scmp.ne.s32.totalorder %s98, %s100
      %p104 = scmp.eq.s32.totalorder %s17, 0
      %p105 = por %p103, %p104
      %p106 = scmp.ne.s32.totalorder %s98, %s100
      %p107 = scmp.eq.s32.totalorder %s22, 1
      %p108 = por %p106, %p107
      %p109 = scmp.ne.s32.totalorder %s100, %s101
      %p110 = scmp.eq.s32.totalorder %s22, 0
      %p111 = por %p109, %p110
      %p112 = scmp.ne.s32.totalorder %s100, %s101
      %p113 = scmp.eq.s32.totalorder %s23, 1
      %p114 = por %p112, %p113
      %p116 = scmp.ne.s32.totalorder %s101, %s115
      %p117 = scmp.eq.s32.totalorder %s23, 0
      %p118 = por %p116, %p117
      %s120 = sadd.s32 %s119, 1
      %p123 = scmp.eq.s32.totalorder %s17, 1
      %p124 = scmp.ne.s32.totalorder %s119, %s121
      %p125 = scmp.eq.s32.totalorder %s17, 0
      %p126 = por %p124, %p125
      %p127 = scmp.ne.s32.totalorder %s119, %s121
      %p128 = scmp.eq.s32.totalorder %s22, 1
      %p129 = por %p127, %p128
      %p130 = scmp.ne.s32.totalorder %s121, %s122
      %p131 = scmp.eq.s32.totalorder %s22, 0
      %p132 = por %p130, %p131
      %p133 = scmp.ne.s32.totalorder %s121, %s122
      %p134 = scmp.eq.s32.totalorder %s23, 1
      %p135 = por %p133, %p134
      %p137 = scmp.ne.s32.totalorder %s122, %s136
      %p138 = scmp.eq.s32.totalorder %s23, 0
      %p139 = por %p137, %p138
      %s141 = sadd.s32 %s140, 1
      %p144 = scmp.eq.s32.totalorder %s17, 1
      %p145 = scmp.ne.s32.totalorder %s140, %s142
      %p146 = scmp.eq.s32.totalorder %s17, 0
      %p147 = por %p145, %p146
      %p148 = scmp.ne.s32.totalorder %s140, %s142
      %p149 = scmp.eq.s32.totalorder %s22, 1
      %p150 = por %p148, %p149
      %p151 = scmp.ne.s32.totalorder %s142, %s143
      %p152 = scmp.eq.s32.totalorder %s22, 0
      %p153 = por %p151, %p152
      %p154 = scmp.ne.s32.totalorder %s142, %s143
      %p155 = scmp.eq.s32.totalorder %s23, 1
      %p156 = por %p154, %p155
      %p158 = scmp.ne.s32.totalorder %s143, %s157
      %p159 = scmp.eq.s32.totalorder %s23, 0
      %p160 = por %p158, %p159
      %s162 = sadd.s32 %s161, 1
      %p165 = scmp.eq.s32.totalorder %s17, 1
      %p166 = scmp.ne.s32.totalorder %s161, %s163
      %p167 = scmp.eq.s32.totalorder %s17, 0
      %p168 = por %p166, %p167
      %p169 = scmp.ne.s32.totalorder %s161, %s163
      %p170 = scmp.eq.s32.totalorder %s22, 1
      %p171 = por %p169, %p170
      %p172 = scmp.ne.s32.totalorder %s163, %s164
      %p173 = scmp.eq.s32.totalorder %s22, 0
      %p174 = por %p172, %p173
      %p175 = scmp.ne.s32.totalorder %s163, %s164
      %p176 = scmp.eq.s32.totalorder %s23, 1
      %p177 = por %p175, %p176
      %p179 = scmp.ne.s32.totalorder %s164, %s178
      %p180 = scmp.eq.s32.totalorder %s23, 0
      %p181 = por %p179, %p180
      %s183 = sadd.s32 %s182, 1
      %p186 = scmp.eq.s32.totalorder %s17, 1
      %p187 = scmp.ne.s32.totalorder %s182, %s184
      %p188 = scmp.eq.s32.totalorder %s17, 0
      %p189 = por %p187, %p188
      %p190 = scmp.ne.s32.totalorder %s182, %s184
      %p191 = scmp.eq.s32.totalorder %s22, 1
      %p192 = por %p190, %p191
      %p193 = scmp.ne.s32.totalorder %s184, %s185
      %p194 = scmp.eq.s32.totalorder %s22, 0
      %p195 = por %p193, %p194
      %p196 = scmp.ne.s32.totalorder %s184, %s185
      %p197 = scmp.eq.s32.totalorder %s23, 1
      %p198 = por %p196, %p197
      %p200 = scmp.ne.s32.totalorder %s185, %s199
      %p201 = scmp.eq.s32.totalorder %s23, 0
      %p202 = por %p200, %p201
      %s203 = ssub.s32 %s17, %s24
      %p204 = scmp.eq.s32.totalorder %s203, 0
      %s206 = sadd.s32 %s205, 1
      %s207 = scalar_select %p204, %s205, %s206
      %p210 = pneg %p204
      %p211 = scmp.eq.s32.totalorder %s17, 1
      %p212 = por %p210, %p211
      %p213 = scmp.ne.s32.totalorder %s205, %s208
      %p214 = scmp.eq.s32.totalorder %s17, 0
      %p215 = por %p213, %p214
      %p216 = scmp.ne.s32.totalorder %s205, %s208
      %p217 = scmp.eq.s32.totalorder %s22, 1
      %p218 = por %p216, %p217
      %p219 = scmp.ne.s32.totalorder %s208, %s209
      %p220 = scmp.eq.s32.totalorder %s22, 0
      %p221 = por %p219, %p220
      %p222 = scmp.ne.s32.totalorder %s208, %s209
      %p223 = scmp.eq.s32.totalorder %s23, 1
      %p224 = por %p222, %p223
      %p226 = scmp.ne.s32.totalorder %s209, %s225
      %p227 = scmp.eq.s32.totalorder %s23, 0
      %p228 = por %p226, %p227
      %p229 = scmp.le.s32.totalorder 1, %s17
      %p230 = scmp.lt.s32.totalorder %s17, 3
      %p231 = pnand %p229, %p230
      %p232 = pneg %p231
      // Predicated region
      $region9: #{tpu_custom_call.1} parent=5 // pred_check
        _
      $region10: #{tpu_custom_call.1} parent=5 // pred_check_branch
        %234 = sbr.rel (%p231) target = $region12
      $region11: #{tpu_custom_call.1} parent=5 // pred_region
        %s235 = ssub.s32 %s17, 1
        // Predicated region
        $region13: #{tpu_custom_call.1} parent=11 // pred_check
          %p236 = pneg %p90
        $region14: #{tpu_custom_call.1} parent=11 // pred_check_branch
          %238 = sbr.rel (%p236) target = $region16
        $region15: #{tpu_custom_call.1} parent=11 // pred_region
          _
        $region16: #{tpu_custom_call.1} parent=11 // pred_fallthru
          _
        // Predicated region
        $region17: #{tpu_custom_call.1} parent=11 // pred_check
          %p239 = pneg %p111
        $region18: #{tpu_custom_call.1} parent=11 // pred_check_branch
          %241 = sbr.rel (%p239) target = $region20
        $region19: #{tpu_custom_call.1} parent=11 // pred_region
          _
        $region20: #{tpu_custom_call.1} parent=11 // pred_fallthru
          _
        // Predicated region
        $region21: #{tpu_custom_call.1} parent=11 // pred_check
          %p242 = pneg %p132
        $region22: #{tpu_custom_call.1} parent=11 // pred_check_branch
          %244 = sbr.rel (%p242) target = $region24
        $region23: #{tpu_custom_call.1} parent=11 // pred_region
          _
        $region24: #{tpu_custom_call.1} parent=11 // pred_fallthru
          _
        // Predicated region
        $region25: #{tpu_custom_call.1} parent=11 // pred_check
          %p245 = pneg %p153
        $region26: #{tpu_custom_call.1} parent=11 // pred_check_branch
          %247 = sbr.rel (%p245) target = $region28
        $region27: #{tpu_custom_call.1} parent=11 // pred_region
          _
        $region28: #{tpu_custom_call.1} parent=11 // pred_fallthru
          _
        // Predicated region
        $region29: #{tpu_custom_call.1} parent=11 // pred_check
          %p248 = pneg %p174
        $region30: #{tpu_custom_call.1} parent=11 // pred_check_branch
          %250 = sbr.rel (%p248) target = $region32
        $region31: #{tpu_custom_call.1} parent=11 // pred_region
          _
        $region32: #{tpu_custom_call.1} parent=11 // pred_fallthru
          _
        // Predicated region
        $region33: #{tpu_custom_call.1} parent=11 // pred_check
          %p251 = pneg %p195
        $region34: #{tpu_custom_call.1} parent=11 // pred_check_branch
          %253 = sbr.rel (%p251) target = $region36
        $region35: #{tpu_custom_call.1} parent=11 // pred_region
          _
        $region36: #{tpu_custom_call.1} parent=11 // pred_fallthru
          _
      $region12: #{tpu_custom_call.1} parent=5 // pred_fallthru
        _
      %p254 = scmp.lt.s32.totalorder %s17, 2
      // Predicated region
      $region37: #{tpu_custom_call.1} parent=5 // pred_check
        %p255 = pneg %p254
      $region38: #{tpu_custom_call.1} parent=5 // pred_check_branch
        %257 = sbr.rel (%p255) target = $region40
      $region39: #{tpu_custom_call.1} parent=5 // pred_region
        // Predicated region
        $region41: #{tpu_custom_call.1} parent=39 // pred_check
          %p258 = pneg %p37
        $region42: #{tpu_custom_call.1} parent=39 // pred_check_branch
          %260 = sbr.rel (%p258) target = $region44
        $region43: #{tpu_custom_call.1} parent=39 // pred_region
          %s261 = smul.u32 32, %s17
          %s262 = ssub.s32 38, %s261
          %p263 = scmp.lt.s32.totalorder %s262, 32
          %s264 = scalar_select %p263, %s262, 32
          %s265 = smul.u32 128, %s264
          %p266 = scmp.lt.s32.totalorder %s261, 37
          %s267 = scalar_select %p266, %s261, 37
          %s268 = smul.addr %s267, 8
          %s269 = scalar_lea.vmem %s0, %s268
          %s270 = smul.u32 32, %s17
          %s271 = ssub.s32 38, %s270
          %p272 = scmp.lt.s32.totalorder %s271, 32
          %s273 = scalar_select %p272, %s271, 32
          %s274 = smul.u32 128, %s273
        $region44: #{tpu_custom_call.1} parent=39 // pred_fallthru
          _
        // Predicated region
        $region45: #{tpu_custom_call.1} parent=39 // pred_check
          %p275 = pneg %p63
        $region46: #{tpu_custom_call.1} parent=39 // pred_check_branch
          %277 = sbr.rel (%p275) target = $region48
        $region47: #{tpu_custom_call.1} parent=39 // pred_region
          %s278 = smul.u32 32, %s17
          %s279 = ssub.s32 38, %s278
          %p280 = scmp.lt.s32.totalorder %s279, 32
          %s281 = scalar_select %p280, %s279, 32
          %s282 = smul.u32 128, %s281
          %s283 = smul.u32 %s282, 3
          %p284 = scmp.lt.s32.totalorder %s278, 37
          %s285 = scalar_select %p284, %s278, 37
          %s286 = smul.addr %s285, 3
          %s287 = smul.addr %s286, 8
          %s288 = scalar_lea.vmem %s1, %s287
          %s289 = smul.u32 32, %s17
          %s290 = ssub.s32 38, %s289
          %p291 = scmp.lt.s32.totalorder %s290, 32
          %s292 = scalar_select %p291, %s290, 32
          %s293 = smul.u32 128, %s292
          %s294 = smul.u32 %s293, 3
        $region48: #{tpu_custom_call.1} parent=39 // pred_fallthru
          _
      $region40: #{tpu_custom_call.1} parent=5 // pred_fallthru
        _
      %p295 = scmp.le.s32.totalorder 1, %s17
      %p296 = scmp.lt.s32.totalorder %s17, 3
      %p297 = pnand %p295, %p296
      %p298 = pneg %p297
      // Predicated region
      $region49: #{tpu_custom_call.1} parent=5 // pred_check
        _
      $region50: #{tpu_custom_call.1} parent=5 // pred_check_branch
        %300 = sbr.rel (%p297) target = $region52
      $region51: #{tpu_custom_call.1} parent=5 // pred_region
        %s301 = ssub.s32 %s17, 1
        %s302 = smul.u32 32, %s22
        %s303 = ssub.s32 38, %s302
        %p304 = scmp.lt.s32.totalorder %s303, 32
        %s305 = scalar_select %p304, %s303, 32
        %s306 = smul.u32 128, %s305
        %p307 = scmp.lt.s32.totalorder %s302, 37
        %s308 = scalar_select %p307, %s302, 37
        %s309 = smul.addr %s308, 8
        %s310 = scalar_lea.vmem %s0, %s309
        %p311 = pneg %p43
        %p312 = pneg %p40
        %s313 = smul.u32 32, %s22
        %s314 = ssub.s32 38, %s313
        %p315 = scmp.lt.s32.totalorder %s314, 32
        %s316 = scalar_select %p315, %s314, 32
        %s317 = smul.u32 128, %s316
        %s318 = smul.u32 %s317, 3
        %p319 = scmp.lt.s32.totalorder %s313, 37
        %s320 = scalar_select %p319, %s313, 37
        %s321 = smul.addr %s320, 3
        %s322 = smul.addr %s321, 8
        %s323 = scalar_lea.vmem %s1, %s322
        %p324 = pneg %p69
        %p325 = pneg %p66
        %p326 = pneg %p90
        %p327 = pneg %p87
        %p328 = pneg %p111
        %p329 = pneg %p108
        %p330 = pneg %p132
        %p331 = pneg %p129
        %p332 = pneg %p153
        %p333 = pneg %p150
        %p334 = pneg %p174
        %p335 = pneg %p171
        %p336 = pneg %p195
        %p337 = pneg %p192
        %p338 = pneg %p221
        %p339 = pneg %p218
        %s340 = sand.u32 %s208, 1
        %s341 = scalar_lea.sflag [#allocation3], %s340
        %s342 = sand.u32 %s208, 1
        %s343 = smul.addr %s342, 16
        %s344 = scalar_lea.vmem [#allocation2], %s343
        %s345 = smul.u32 32, %s22
        %s346 = ssub.s32 38, %s345
        %p347 = scmp.lt.s32.totalorder %s346, 32
        %s348 = scalar_select %p347, %s346, 32
        %s349 = smul.u32 128, %s348
        %p350 = scmp.lt.s32.totalorder %s345, 37
        %s351 = scalar_select %p350, %s345, 37
        %s352 = smul.addr %s351, 8
        %s353 = scalar_lea.vmem %s0, %s352
        %s354 = smul.u32 32, %s22
        %s355 = ssub.s32 38, %s354
        %p356 = scmp.lt.s32.totalorder %s355, 32
        %s357 = scalar_select %p356, %s355, 32
        %s358 = smul.u32 128, %s357
        %s359 = smul.u32 32, %s22
        %s360 = ssub.s32 38, %s359
        %p361 = scmp.lt.s32.totalorder %s360, 32
        %s362 = scalar_select %p361, %s360, 32
        %s363 = smul.u32 128, %s362
        %s364 = smul.u32 %s363, 3
        %p365 = scmp.lt.s32.totalorder %s359, 37
        %s366 = scalar_select %p365, %s359, 37
        %s367 = smul.addr %s366, 3
        %s368 = smul.addr %s367, 8
        %s369 = scalar_lea.vmem %s1, %s368
        %s370 = smul.u32 32, %s22
        %s371 = ssub.s32 38, %s370
        %p372 = scmp.lt.s32.totalorder %s371, 32
        %s373 = scalar_select %p372, %s371, 32
        %s374 = smul.u32 128, %s373
        %s375 = smul.u32 %s374, 3
        %s376 = smul.u32 2, %s22
        %s377 = ssub.s32 3, %s376
        %p378 = scmp.lt.s32.totalorder %s377, 2
        %s379 = scalar_select %p378, %s377, 2
        %s380 = smul.u32 128, %s379
        %v382 = vld [vmem:[%s7] ss:$8 sm:$0x3]
        %v383 = vld [vmem:[%s7 + $0x1] ss:$0 sm:$0xff]
        %v384 = vld [vmem:[%s7 + $0x2] ss:$0 sm:$0xff]
        %v385 = vld [vmem:[%s7 + $0x3] ss:$0 sm:$0xff]
        %v386 = vld [vmem:[%s353] sm:$0xff]
        %v387 = vld [vmem:[%s353 + $0x8] sm:$0xff]
        %v388 = vld [vmem:[%s353 + $0x10] sm:$0xff]
        %v389 = vld [vmem:[%s353 + $0x18] sm:$0xff]
        %v390 = vld [vmem:[%s353 + $0x20] sm:$0xff]
        %v391 = vld [vmem:[%s353 + $0x28] sm:$0xff]
        %v392 = vld [vmem:[%s353 + $0x30] sm:$0xff]
        %v393 = vld [vmem:[%s353 + $0x38] sm:$0xff]
        %v394 = vld [vmem:[%s353 + $0x40] sm:$0xff]
        %v395 = vld [vmem:[%s353 + $0x48] sm:$0xff]
        %v396 = vld [vmem:[%s353 + $0x50] sm:$0xff]
        %v397 = vld [vmem:[%s353 + $0x58] sm:$0xff]
        %v398 = vld [vmem:[%s353 + $0x60] sm:$0xff]
        %v399 = vld [vmem:[%s353 + $0x68] sm:$0xff]
        %v400 = vld [vmem:[%s353 + $0x70] sm:$0xff]
        %v401 = vld [vmem:[%s353 + $0x78] sm:$0xff]
        %v402 = vld [vmem:[%s353 + $0x80] sm:$0xff]
        %v403 = vld [vmem:[%s353 + $0x88] sm:$0xff]
        %v404 = vld [vmem:[%s353 + $0x90] sm:$0xff]
        %v405 = vld [vmem:[%s353 + $0x98] sm:$0xff]
        %v406 = vld [vmem:[%s353 + $0xa0] sm:$0xff]
        %v407 = vld [vmem:[%s353 + $0xa8] sm:$0xff]
        %v408 = vld [vmem:[%s353 + $0xb0] sm:$0xff]
        %v409 = vld [vmem:[%s353 + $0xb8] sm:$0xff]
        %v410 = vld [vmem:[%s353 + $0xc0] sm:$0xff]
        %v411 = vld [vmem:[%s353 + $0xc8] sm:$0xff]
        %v412 = vld [vmem:[%s353 + $0xd0] sm:$0xff]
        %v413 = vld [vmem:[%s353 + $0xd8] sm:$0xff]
        %v414 = vld [vmem:[%s353 + $0xe0] sm:$0xff]
        %v415 = vld [vmem:[%s353 + $0xe8] sm:$0xff]
        %v416 = vld [vmem:[%s353 + $0xf0] sm:$0xff]
        %v417 = vld [vmem:[%s353 + $0xf8] sm:$0xff]
        %v418 = vpack.c.bf16 %v387, %v386
        %v419 = vpack.c.bf16 %v389, %v388
        %v420 = vpack.c.bf16 %v391, %v390
        %v421 = vpack.c.bf16 %v393, %v392
        %v422 = vpack.c.bf16 %v395, %v394
        %v423 = vpack.c.bf16 %v397, %v396
        %v424 = vpack.c.bf16 %v399, %v398
        %v425 = vpack.c.bf16 %v401, %v400
        %v426 = vpack.c.bf16 %v403, %v402
        %v427 = vpack.c.bf16 %v405, %v404
        %v428 = vpack.c.bf16 %v407, %v406
        %v429 = vpack.c.bf16 %v409, %v408
        %v430 = vpack.c.bf16 %v411, %v410
        %v431 = vpack.c.bf16 %v413, %v412
        %v432 = vpack.c.bf16 %v415, %v414
        %v433 = vpack.c.bf16 %v417, %v416
        %v434 = vld [vmem:[%s369] sm:$0xff]
        %v435 = vld [vmem:[%s369 + $0x8] sm:$0xff]
        %v436 = vld [vmem:[%s369 + $0x10] sm:$0xff]
        %v437 = vld [vmem:[%s369 + $0x18] sm:$0xff]
        %v438 = vld [vmem:[%s369 + $0x20] sm:$0xff]
        %v439 = vld [vmem:[%s369 + $0x28] sm:$0xff]
        %v440 = vld [vmem:[%s369 + $0x30] sm:$0xff]
        %v441 = vld [vmem:[%s369 + $0x38] sm:$0xff]
        %v442 = vld [vmem:[%s369 + $0x40] sm:$0xff]
        %v443 = vld [vmem:[%s369 + $0x48] sm:$0xff]
        %v444 = vld [vmem:[%s369 + $0x50] sm:$0xff]
        %v445 = vld [vmem:[%s369 + $0x58] sm:$0xff]
        %v446 = vld [vmem:[%s369 + $0x60] sm:$0xff]
        %v447 = vld [vmem:[%s369 + $0x68] sm:$0xff]
        %v448 = vld [vmem:[%s369 + $0x70] sm:$0xff]
        %v449 = vld [vmem:[%s369 + $0x78] sm:$0xff]
        %v450 = vld [vmem:[%s369 + $0x80] sm:$0xff]
        %v451 = vld [vmem:[%s369 + $0x88] sm:$0xff]
        %v452 = vld [vmem:[%s369 + $0x90] sm:$0xff]
        %v453 = vld [vmem:[%s369 + $0x98] sm:$0xff]
        %v454 = vld [vmem:[%s369 + $0xa0] sm:$0xff]
        %v455 = vld [vmem:[%s369 + $0xa8] sm:$0xff]
        %v456 = vld [vmem:[%s369 + $0xb0] sm:$0xff]
        %v457 = vld [vmem:[%s369 + $0xb8] sm:$0xff]
        %v458 = vld [vmem:[%s369 + $0xc0] sm:$0xff]
        %v459 = vld [vmem:[%s369 + $0xc8] sm:$0xff]
        %v460 = vld [vmem:[%s369 + $0xd0] sm:$0xff]
        %v461 = vld [vmem:[%s369 + $0xd8] sm:$0xff]
        %v462 = vld [vmem:[%s369 + $0xe0] sm:$0xff]
        %v463 = vld [vmem:[%s369 + $0xe8] sm:$0xff]
        %v464 = vld [vmem:[%s369 + $0xf0] sm:$0xff]
        %v465 = vld [vmem:[%s369 + $0xf8] sm:$0xff]
        %v466 = vld [vmem:[%s369 + $0x100] sm:$0xff]
        %v467 = vld [vmem:[%s369 + $0x108] sm:$0xff]
        %v468 = vld [vmem:[%s369 + $0x110] sm:$0xff]
        %v469 = vld [vmem:[%s369 + $0x118] sm:$0xff]
        %v470 = vld [vmem:[%s369 + $0x120] sm:$0xff]
        %v471 = vld [vmem:[%s369 + $0x128] sm:$0xff]
        %v472 = vld [vmem:[%s369 + $0x130] sm:$0xff]
        %v473 = vld [vmem:[%s369 + $0x138] sm:$0xff]
        %v474 = vld [vmem:[%s369 + $0x140] sm:$0xff]
        %v475 = vld [vmem:[%s369 + $0x148] sm:$0xff]
        %v476 = vld [vmem:[%s369 + $0x150] sm:$0xff]
        %v477 = vld [vmem:[%s369 + $0x158] sm:$0xff]
        %v478 = vld [vmem:[%s369 + $0x160] sm:$0xff]
        %v479 = vld [vmem:[%s369 + $0x168] sm:$0xff]
        %v480 = vld [vmem:[%s369 + $0x170] sm:$0xff]
        %v481 = vld [vmem:[%s369 + $0x178] sm:$0xff]
        %v482 = vld [vmem:[%s369 + $0x180] sm:$0xff]
        %v483 = vld [vmem:[%s369 + $0x188] sm:$0xff]
        %v484 = vld [vmem:[%s369 + $0x190] sm:$0xff]
        %v485 = vld [vmem:[%s369 + $0x198] sm:$0xff]
        %v486 = vld [vmem:[%s369 + $0x1a0] sm:$0xff]
        %v487 = vld [vmem:[%s369 + $0x1a8] sm:$0xff]
        %v488 = vld [vmem:[%s369 + $0x1b0] sm:$0xff]
        %v489 = vld [vmem:[%s369 + $0x1b8] sm:$0xff]
        %v490 = vld [vmem:[%s369 + $0x1c0] sm:$0xff]
        %v491 = vld [vmem:[%s369 + $0x1c8] sm:$0xff]
        %v492 = vld [vmem:[%s369 + $0x1d0] sm:$0xff]
        %v493 = vld [vmem:[%s369 + $0x1d8] sm:$0xff]
        %v494 = vld [vmem:[%s369 + $0x1e0] sm:$0xff]
        %v495 = vld [vmem:[%s369 + $0x1e8] sm:$0xff]
        %v496 = vld [vmem:[%s369 + $0x1f0] sm:$0xff]
        %v497 = vld [vmem:[%s369 + $0x1f8] sm:$0xff]
        %v498 = vld [vmem:[%s369 + $0x200] sm:$0xff]
        %v499 = vld [vmem:[%s369 + $0x208] sm:$0xff]
        %v500 = vld [vmem:[%s369 + $0x210] sm:$0xff]
        %v501 = vld [vmem:[%s369 + $0x218] sm:$0xff]
        %v502 = vld [vmem:[%s369 + $0x220] sm:$0xff]
        %v503 = vld [vmem:[%s369 + $0x228] sm:$0xff]
        %v504 = vld [vmem:[%s369 + $0x230] sm:$0xff]
        %v505 = vld [vmem:[%s369 + $0x238] sm:$0xff]
        %v506 = vld [vmem:[%s369 + $0x240] sm:$0xff]
        %v507 = vld [vmem:[%s369 + $0x248] sm:$0xff]
        %v508 = vld [vmem:[%s369 + $0x250] sm:$0xff]
        %v509 = vld [vmem:[%s369 + $0x258] sm:$0xff]
        %v510 = vld [vmem:[%s369 + $0x260] sm:$0xff]
        %v511 = vld [vmem:[%s369 + $0x268] sm:$0xff]
        %v512 = vld [vmem:[%s369 + $0x270] sm:$0xff]
        %v513 = vld [vmem:[%s369 + $0x278] sm:$0xff]
        %v514 = vld [vmem:[%s369 + $0x280] sm:$0xff]
        %v515 = vld [vmem:[%s369 + $0x288] sm:$0xff]
        %v516 = vld [vmem:[%s369 + $0x290] sm:$0xff]
        %v517 = vld [vmem:[%s369 + $0x298] sm:$0xff]
        %v518 = vld [vmem:[%s369 + $0x2a0] sm:$0xff]
        %v519 = vld [vmem:[%s369 + $0x2a8] sm:$0xff]
        %v520 = vld [vmem:[%s369 + $0x2b0] sm:$0xff]
        %v521 = vld [vmem:[%s369 + $0x2b8] sm:$0xff]
        %v522 = vld [vmem:[%s369 + $0x2c0] sm:$0xff]
        %v523 = vld [vmem:[%s369 + $0x2c8] sm:$0xff]
        %v524 = vld [vmem:[%s369 + $0x2d0] sm:$0xff]
        %v525 = vld [vmem:[%s369 + $0x2d8] sm:$0xff]
        %v526 = vld [vmem:[%s369 + $0x2e0] sm:$0xff]
        %v527 = vld [vmem:[%s369 + $0x2e8] sm:$0xff]
        %v528 = vld [vmem:[%s369 + $0x2f0] sm:$0xff]
        %v529 = vld [vmem:[%s369 + $0x2f8] sm:$0xff]
        %v530 = vpack.c.bf16 %v437, %v434
        %v531 = vpack.c.bf16 %v438, %v435
        %v532 = vpack.c.bf16 %v439, %v436
        %v533 = vpack.c.bf16 %v443, %v440
        %v534 = vpack.c.bf16 %v444, %v441
        %v535 = vpack.c.bf16 %v445, %v442
        %v536 = vpack.c.bf16 %v449, %v446
        %v537 = vpack.c.bf16 %v450, %v447
        %v538 = vpack.c.bf16 %v451, %v448
        %v539 = vpack.c.bf16 %v455, %v452
        %v540 = vpack.c.bf16 %v456, %v453
        %v541 = vpack.c.bf16 %v457, %v454
        %v542 = vpack.c.bf16 %v461, %v458
        %v543 = vpack.c.bf16 %v462, %v459
        %v544 = vpack.c.bf16 %v463, %v460
        %v545 = vpack.c.bf16 %v467, %v464
        %v546 = vpack.c.bf16 %v468, %v465
        %v547 = vpack.c.bf16 %v469, %v466
        %v548 = vpack.c.bf16 %v473, %v470
        %v549 = vpack.c.bf16 %v474, %v471
        %v550 = vpack.c.bf16 %v475, %v472
        %v551 = vpack.c.bf16 %v479, %v476
        %v552 = vpack.c.bf16 %v480, %v477
        %v553 = vpack.c.bf16 %v481, %v478
        %v554 = vpack.c.bf16 %v485, %v482
        %v555 = vpack.c.bf16 %v486, %v483
        %v556 = vpack.c.bf16 %v487, %v484
        %v557 = vpack.c.bf16 %v491, %v488
        %v558 = vpack.c.bf16 %v492, %v489
        %v559 = vpack.c.bf16 %v493, %v490
        %v560 = vpack.c.bf16 %v497, %v494
        %v561 = vpack.c.bf16 %v498, %v495
        %v562 = vpack.c.bf16 %v499, %v496
        %v563 = vpack.c.bf16 %v503, %v500
        %v564 = vpack.c.bf16 %v504, %v501
        %v565 = vpack.c.bf16 %v505, %v502
        %v566 = vpack.c.bf16 %v509, %v506
        %v567 = vpack.c.bf16 %v510, %v507
        %v568 = vpack.c.bf16 %v511, %v508
        %v569 = vpack.c.bf16 %v515, %v512
        %v570 = vpack.c.bf16 %v516, %v513
        %v571 = vpack.c.bf16 %v517, %v514
        %v572 = vpack.c.bf16 %v521, %v518
        %v573 = vpack.c.bf16 %v522, %v519
        %v574 = vpack.c.bf16 %v523, %v520
        %v575 = vpack.c.bf16 %v527, %v524
        %v576 = vpack.c.bf16 %v528, %v525
        %v577 = vpack.c.bf16 %v529, %v526
        %v578 = vld [vmem:[%s2] sm:$0xff]
        %v579 = vld [vmem:[%s2 + $0x8] sm:$0xff]
        %v580 = vld [vmem:[%s2 + $0x10] sm:$0xff]
        %v581 = vld [vmem:[%s2 + $0x18] sm:$0xff]
        %v582 = vld [vmem:[%s2 + $0x20] sm:$0xff]
        %v583 = vld [vmem:[%s2 + $0x28] sm:$0xff]
        %v584 = vld [vmem:[%s2 + $0x30] sm:$0xff]
        %v585 = vld [vmem:[%s2 + $0x38] sm:$0xff]
        %v586 = vld [vmem:[%s3] sm:$0xff]
        %v587 = vld [vmem:[%s3 + $0x8] sm:$0xff]
        %v588 = vld [vmem:[%s3 + $0x10] sm:$0xff]
        %v589 = vld [vmem:[%s3 + $0x18] sm:$0xff]
        %v590 = vld [vmem:[%s3 + $0x20] sm:$0xff]
        %v591 = vld [vmem:[%s3 + $0x28] sm:$0xff]
        %v592 = vld [vmem:[%s3 + $0x30] sm:$0xff]
        %v593 = vld [vmem:[%s3 + $0x38] sm:$0xff]
        %v594 = vld [vmem:[%s3 + $0x40] sm:$0xff]
        %v595 = vld [vmem:[%s3 + $0x48] sm:$0xff]
        %v596 = vld [vmem:[%s3 + $0x50] sm:$0xff]
        %v597 = vld [vmem:[%s3 + $0x58] sm:$0xff]
        %v598 = vld [vmem:[%s3 + $0x60] sm:$0xff]
        %v599 = vld [vmem:[%s3 + $0x68] sm:$0xff]
        %v600 = vld [vmem:[%s3 + $0x70] sm:$0xff]
        %v601 = vld [vmem:[%s3 + $0x78] sm:$0xff]
        %v602 = vld [vmem:[%s3 + $0x80] sm:$0xff]
        %v603 = vld [vmem:[%s3 + $0x88] sm:$0xff]
        %v604 = vld [vmem:[%s3 + $0x90] sm:$0xff]
        %v605 = vld [vmem:[%s3 + $0x98] sm:$0xff]
        %v606 = vld [vmem:[%s3 + $0xa0] sm:$0xff]
        %v607 = vld [vmem:[%s3 + $0xa8] sm:$0xff]
        %v608 = vld [vmem:[%s3 + $0xb0] sm:$0xff]
        %v609 = vld [vmem:[%s3 + $0xb8] sm:$0xff]
        %v610 = vld [vmem:[%s3 + $0xc0] sm:$0xff]
        %v611 = vld [vmem:[%s3 + $0xc8] sm:$0xff]
        %v612 = vld [vmem:[%s3 + $0xd0] sm:$0xff]
        %v613 = vld [vmem:[%s3 + $0xd8] sm:$0xff]
        %v614 = vld [vmem:[%s3 + $0xe0] sm:$0xff]
        %v615 = vld [vmem:[%s3 + $0xe8] sm:$0xff]
        %v616 = vld [vmem:[%s3 + $0xf0] sm:$0xff]
        %v617 = vld [vmem:[%s3 + $0xf8] sm:$0xff]
        %v618 = vld [vmem:[%s3 + $0x100] sm:$0xff]
        %v619 = vld [vmem:[%s3 + $0x108] sm:$0xff]
        %v620 = vld [vmem:[%s3 + $0x110] sm:$0xff]
        %v621 = vld [vmem:[%s3 + $0x118] sm:$0xff]
        %v622 = vld [vmem:[%s3 + $0x120] sm:$0xff]
        %v623 = vld [vmem:[%s3 + $0x128] sm:$0x33]
        %v662 = vunpack.c.l.b16 %v586
        %v663 = vunpack.c.h.b16 %v586
        %v664 = vunpack.c.l.b16 %v587
        %v665 = vunpack.c.h.b16 %v587
        %v666 = vunpack.c.l.b16 %v588
        %v667 = vunpack.c.h.b16 %v588
        %v668 = vunpack.c.l.b16 %v589
        %v669 = vunpack.c.h.b16 %v589
        %v670 = vunpack.c.l.b16 %v590
        %v671 = vunpack.c.h.b16 %v590
        %v672 = vunpack.c.l.b16 %v591
        %v673 = vunpack.c.h.b16 %v591
        %v674 = vunpack.c.l.b16 %v592
        %v675 = vunpack.c.h.b16 %v592
        %v676 = vunpack.c.l.b16 %v593
        %v677 = vunpack.c.h.b16 %v593
        %v678 = vunpack.c.l.b16 %v594
        %v679 = vunpack.c.h.b16 %v594
        %v680 = vunpack.c.l.b16 %v595
        %v681 = vunpack.c.h.b16 %v595
        %v682 = vunpack.c.l.b16 %v596
        %v683 = vunpack.c.h.b16 %v596
        %v684 = vunpack.c.l.b16 %v597
        %v685 = vunpack.c.h.b16 %v597
        %v686 = vunpack.c.l.b16 %v598
        %v687 = vunpack.c.h.b16 %v598
        %v688 = vunpack.c.l.b16 %v599
        %v689 = vunpack.c.h.b16 %v599
        %v690 = vunpack.c.l.b16 %v600
        %v691 = vunpack.c.h.b16 %v600
        %v692 = vunpack.c.l.b16 %v601
        %v693 = vunpack.c.h.b16 %v601
        %v694 = vunpack.c.l.b16 %v602
        %v695 = vunpack.c.h.b16 %v602
        %v696 = vunpack.c.l.b16 %v603
        %v697 = vunpack.c.h.b16 %v603
        %v698 = vunpack.c.l.b16 %v604
        %v699 = vunpack.c.h.b16 %v604
        %v700 = vunpack.c.l.b16 %v605
        %v701 = vunpack.c.h.b16 %v605
        %v702 = vunpack.c.l.b16 %v606
        %v703 = vunpack.c.h.b16 %v606
        %v704 = vunpack.c.l.b16 %v607
        %v705 = vunpack.c.h.b16 %v607
        %v706 = vunpack.c.l.b16 %v608
        %v707 = vunpack.c.h.b16 %v608
        %v708 = vunpack.c.l.b16 %v609
        %v709 = vunpack.c.h.b16 %v609
        %v710 = vunpack.c.l.b16 %v610
        %v711 = vunpack.c.h.b16 %v610
        %v712 = vunpack.c.l.b16 %v611
        %v713 = vunpack.c.h.b16 %v611
        %v714 = vunpack.c.l.b16 %v612
        %v715 = vunpack.c.h.b16 %v612
        %v716 = vunpack.c.l.b16 %v613
        %v717 = vunpack.c.h.b16 %v613
        %v718 = vunpack.c.l.b16 %v614
        %v719 = vunpack.c.h.b16 %v614
        %v720 = vunpack.c.l.b16 %v615
        %v721 = vunpack.c.h.b16 %v615
        %v722 = vunpack.c.l.b16 %v616
        %v723 = vunpack.c.h.b16 %v616
        %v724 = vunpack.c.l.b16 %v617
        %v725 = vunpack.c.h.b16 %v617
        %v726 = vunpack.c.l.b16 %v618
        %v727 = vunpack.c.h.b16 %v618
        %v728 = vunpack.c.l.b16 %v619
        %v729 = vunpack.c.h.b16 %v619
        %v730 = vunpack.c.l.b16 %v620
        %v731 = vunpack.c.h.b16 %v620
        %v732 = vunpack.c.l.b16 %v621
        %v733 = vunpack.c.h.b16 %v621
        %v734 = vunpack.c.l.b16 %v622
        %v735 = vunpack.c.h.b16 %v622
        %v736 = vunpack.c.l.b16 %v623
        %v737 = vunpack.c.h.b16 %v623
        %v738 = vpack.c.b16 %v664, %v662
        %v739 = vpack.c.b16 %v665, %v663
        %v740 = vpack.c.b16 %v668, %v666
        %v741 = vpack.c.b16 %v669, %v667
        %v742 = vpack.c.b16 %v672, %v670
        %v743 = vpack.c.b16 %v673, %v671
        %v744 = vpack.c.b16 %v676, %v674
        %v745 = vpack.c.b16 %v677, %v675
        %v746 = vpack.c.b16 %v680, %v678
        %v747 = vpack.c.b16 %v681, %v679
        %v748 = vpack.c.b16 %v684, %v682
        %v749 = vpack.c.b16 %v685, %v683
        %v750 = vpack.c.b16 %v688, %v686
        %v751 = vpack.c.b16 %v689, %v687
        %v752 = vpack.c.b16 %v692, %v690
        %v753 = vpack.c.b16 %v693, %v691
        %v754 = vpack.c.b16 %v696, %v694
        %v755 = vpack.c.b16 %v697, %v695
        %v756 = vpack.c.b16 %v700, %v698
        %v757 = vpack.c.b16 %v701, %v699
        %v758 = vpack.c.b16 %v704, %v702
        %v759 = vpack.c.b16 %v705, %v703
        %v760 = vpack.c.b16 %v708, %v706
        %v761 = vpack.c.b16 %v709, %v707
        %v762 = vpack.c.b16 %v712, %v710
        %v763 = vpack.c.b16 %v713, %v711
        %v764 = vpack.c.b16 %v716, %v714
        %v765 = vpack.c.b16 %v717, %v715
        %v766 = vpack.c.b16 %v720, %v718
        %v767 = vpack.c.b16 %v721, %v719
        %v768 = vpack.c.b16 %v724, %v722
        %v769 = vpack.c.b16 %v725, %v723
        %v770 = vpack.c.b16 %v728, %v726
        %v771 = vpack.c.b16 %v729, %v727
        %v772 = vpack.c.b16 %v732, %v730
        %v773 = vpack.c.b16 %v733, %v731
        %v774 = vpack.c.b16 %v736, %v734
        %v775 = vpack.c.b16 %v737, %v735
        %vm812 = vcmask 359424
        %v814 = vsel %vm812, %v532, 0
        %v817 = vsel %vm812, %v535, 0
        %v820 = vsel %vm812, %v538, 0
        %v823 = vsel %vm812, %v541, 0
        %v826 = vsel %vm812, %v544, 0
        %v829 = vsel %vm812, %v547, 0
        %v832 = vsel %vm812, %v550, 0
        %v835 = vsel %vm812, %v553, 0
        %v838 = vsel %vm812, %v556, 0
        %v841 = vsel %vm812, %v559, 0
        %v844 = vsel %vm812, %v562, 0
        %v847 = vsel %vm812, %v565, 0
        %v850 = vsel %vm812, %v568, 0
        %v853 = vsel %vm812, %v571, 0
        %v856 = vsel %vm812, %v574, 0
        %v859 = vsel %vm812, %v577, 0
        %vm861 = vcmask 1045504
        %v863 = vsel %vm861, %v774, 0
        %v866 = vsel %vm861, %v775, 0
        %868 = vmatprep.subr.bf16.mxu0 %v753
        %869 = vmatpush1.bf16.msra.mxu0 %v752
        %870 = vmatprep.subr.bf16.mxu0 %v751
        %871 = vmatpush1.bf16.msra.mxu0 %v750
        %872 = vmatprep.subr.bf16.mxu0 %v749
        %873 = vmatpush1.bf16.msra.mxu0 %v748
        %874 = vmatprep.subr.bf16.mxu0 %v747
        %875 = vmatpush1.bf16.msra.mxu0 %v746
        %876 = vmatprep.subr.bf16.mxu0 %v745
        %877 = vmatpush1.bf16.msra.mxu0 %v744
        %878 = vmatprep.subr.bf16.mxu0 %v743
        %879 = vmatpush1.bf16.msra.mxu0 %v742
        %880 = vmatprep.subr.bf16.mxu0 %v741
        %881 = vmatpush1.bf16.msra.mxu0 %v740
        %882 = vmatprep.subr.bf16.mxu0 %v739
        %883 = vmatpush1.bf16.msra.mxu0 %v738
        %884 = vmatprep.subr.bf16.mxu0 %v769
        %885 = vmatpush2.bf16.msra.mxu0 %v768
        %886 = vmatprep.subr.bf16.mxu0 %v767
        %887 = vmatpush2.bf16.msra.mxu0 %v766
        %888 = vmatprep.subr.bf16.mxu0 %v765
        %889 = vmatpush2.bf16.msra.mxu0 %v764
        %890 = vmatprep.subr.bf16.mxu0 %v763
        %891 = vmatpush2.bf16.msra.mxu0 %v762
        %892 = vmatprep.subr.bf16.mxu0 %v761
        %893 = vmatpush2.bf16.msra.mxu0 %v760
        %894 = vmatprep.subr.bf16.mxu0 %v759
        %895 = vmatpush2.bf16.msra.mxu0 %v758
        %896 = vmatprep.subr.bf16.mxu0 %v757
        %897 = vmatpush2.bf16.msra.mxu0 %v756
        %898 = vmatprep.subr.bf16.mxu0 %v755
        %899 = vmatpush2.bf16.msra.mxu0 %v754
        %900 = vmatprep.mubr.bf16.mxu0 %v531
        %901 = vmatmul.mubr.bf16.gmra.mxu0 %v530
        %v902 = vpop.f32.mrf.mxu0
        %v903 = vadd.f32 0.0, %v902
        %v904 = vpop.f32.mrf.mxu0
        %v905 = vadd.f32 0.0, %v904
        %v906 = vpop.f32.mrf.mxu0
        %v907 = vadd.f32 0.0, %v906
        %v908 = vpop.f32.mrf.mxu0
        %v909 = vadd.f32 0.0, %v908
        %910 = vmatprep.mubr.bf16.mxu0 %v534
        %911 = vmatmul.mubr.bf16.gmra.mxu0 %v533
        %v912 = vpop.f32.mrf.mxu0
        %v913 = vadd.f32 0.0, %v912
        %v914 = vpop.f32.mrf.mxu0
        %v915 = vadd.f32 0.0, %v914
        %v916 = vpop.f32.mrf.mxu0
        %v917 = vadd.f32 0.0, %v916
        %v918 = vpop.f32.mrf.mxu0
        %v919 = vadd.f32 0.0, %v918
        %920 = vmatprep.mubr.bf16.mxu0 %v537
        %921 = vmatmul.mubr.bf16.gmra.mxu0 %v536
        %v922 = vpop.f32.mrf.mxu0
        %v923 = vadd.f32 0.0, %v922
        %v924 = vpop.f32.mrf.mxu0
        %v925 = vadd.f32 0.0, %v924
        %v926 = vpop.f32.mrf.mxu0
        %v927 = vadd.f32 0.0, %v926
        %v928 = vpop.f32.mrf.mxu0
        %v929 = vadd.f32 0.0, %v928
        %930 = vmatprep.mubr.bf16.mxu0 %v540
        %931 = vmatmul.mubr.bf16.gmra.mxu0 %v539
        %v932 = vpop.f32.mrf.mxu0
        %v933 = vadd.f32 0.0, %v932
        %v934 = vpop.f32.mrf.mxu0
        %v935 = vadd.f32 0.0, %v934
        %v936 = vpop.f32.mrf.mxu0
        %v937 = vadd.f32 0.0, %v936
        %v938 = vpop.f32.mrf.mxu0
        %v939 = vadd.f32 0.0, %v938
        %940 = vmatprep.mubr.bf16.mxu0 %v543
        %941 = vmatmul.mubr.bf16.gmra.mxu0 %v542
        %v942 = vpop.f32.mrf.mxu0
        %v943 = vadd.f32 0.0, %v942
        %v944 = vpop.f32.mrf.mxu0
        %v945 = vadd.f32 0.0, %v944
        %v946 = vpop.f32.mrf.mxu0
        %v947 = vadd.f32 0.0, %v946
        %v948 = vpop.f32.mrf.mxu0
        %v949 = vadd.f32 0.0, %v948
        %950 = vmatprep.mubr.bf16.mxu0 %v546
        %951 = vmatmul.mubr.bf16.gmra.mxu0 %v545
        %v952 = vpop.f32.mrf.mxu0
        %v953 = vadd.f32 0.0, %v952
        %v954 = vpop.f32.mrf.mxu0
        %v955 = vadd.f32 0.0, %v954
        %v956 = vpop.f32.mrf.mxu0
        %v957 = vadd.f32 0.0, %v956
        %v958 = vpop.f32.mrf.mxu0
        %v959 = vadd.f32 0.0, %v958
        %960 = vmatprep.mubr.bf16.mxu0 %v549
        %961 = vmatmul.mubr.bf16.gmra.mxu0 %v548
        %v962 = vpop.f32.mrf.mxu0
        %v963 = vadd.f32 0.0, %v962
        %v964 = vpop.f32.mrf.mxu0
        %v965 = vadd.f32 0.0, %v964
        %v966 = vpop.f32.mrf.mxu0
        %v967 = vadd.f32 0.0, %v966
        %v968 = vpop.f32.mrf.mxu0
        %v969 = vadd.f32 0.0, %v968
        %970 = vmatprep.mubr.bf16.mxu0 %v552
        %971 = vmatmul.mubr.bf16.gmra.mxu0 %v551
        %v972 = vpop.f32.mrf.mxu0
        %v973 = vadd.f32 0.0, %v972
        %v974 = vpop.f32.mrf.mxu0
        %v975 = vadd.f32 0.0, %v974
        %v976 = vpop.f32.mrf.mxu0
        %v977 = vadd.f32 0.0, %v976
        %v978 = vpop.f32.mrf.mxu0
        %v979 = vadd.f32 0.0, %v978
        %980 = vmatprep.mubr.bf16.mxu0 %v555
        %981 = vmatmul.mubr.bf16.gmra.mxu0 %v554
        %v982 = vpop.f32.mrf.mxu0
        %v983 = vadd.f32 0.0, %v982
        %v984 = vpop.f32.mrf.mxu0
        %v985 = vadd.f32 0.0, %v984
        %v986 = vpop.f32.mrf.mxu0
        %v987 = vadd.f32 0.0, %v986
        %v988 = vpop.f32.mrf.mxu0
        %v989 = vadd.f32 0.0, %v988
        %990 = vmatprep.mubr.bf16.mxu0 %v558
        %991 = vmatmul.mubr.bf16.gmra.mxu0 %v557
        %v992 = vpop.f32.mrf.mxu0
        %v993 = vadd.f32 0.0, %v992
        %v994 = vpop.f32.mrf.mxu0
        %v995 = vadd.f32 0.0, %v994
        %v996 = vpop.f32.mrf.mxu0
        %v997 = vadd.f32 0.0, %v996
        %v998 = vpop.f32.mrf.mxu0
        %v999 = vadd.f32 0.0, %v998
        %1000 = vmatprep.mubr.bf16.mxu0 %v561
        %1001 = vmatmul.mubr.bf16.gmra.mxu0 %v560
        %v1002 = vpop.f32.mrf.mxu0
        %v1003 = vadd.f32 0.0, %v1002
        %v1004 = vpop.f32.mrf.mxu0
        %v1005 = vadd.f32 0.0, %v1004
        %v1006 = vpop.f32.mrf.mxu0
        %v1007 = vadd.f32 0.0, %v1006
        %v1008 = vpop.f32.mrf.mxu0
        %v1009 = vadd.f32 0.0, %v1008
        %1010 = vmatprep.mubr.bf16.mxu0 %v564
        %1011 = vmatmul.mubr.bf16.gmra.mxu0 %v563
        %v1012 = vpop.f32.mrf.mxu0
        %v1013 = vadd.f32 0.0, %v1012
        %v1014 = vpop.f32.mrf.mxu0
        %v1015 = vadd.f32 0.0, %v1014
        %v1016 = vpop.f32.mrf.mxu0
        %v1017 = vadd.f32 0.0, %v1016
        %v1018 = vpop.f32.mrf.mxu0
        %v1019 = vadd.f32 0.0, %v1018
        %1020 = vmatprep.mubr.bf16.mxu0 %v567
        %1021 = vmatmul.mubr.bf16.gmra.mxu0 %v566
        %v1022 = vpop.f32.mrf.mxu0
        %v1023 = vadd.f32 0.0, %v1022
        %v1024 = vpop.f32.mrf.mxu0
        %v1025 = vadd.f32 0.0, %v1024
        %v1026 = vpop.f32.mrf.mxu0
        %v1027 = vadd.f32 0.0, %v1026
        %v1028 = vpop.f32.mrf.mxu0
        %v1029 = vadd.f32 0.0, %v1028
        %1030 = vmatprep.mubr.bf16.mxu0 %v570
        %1031 = vmatmul.mubr.bf16.gmra.mxu0 %v569
        %v1032 = vpop.f32.mrf.mxu0
        %v1033 = vadd.f32 0.0, %v1032
        %v1034 = vpop.f32.mrf.mxu0
        %v1035 = vadd.f32 0.0, %v1034
        %v1036 = vpop.f32.mrf.mxu0
        %v1037 = vadd.f32 0.0, %v1036
        %v1038 = vpop.f32.mrf.mxu0
        %v1039 = vadd.f32 0.0, %v1038
        %1040 = vmatprep.mubr.bf16.mxu0 %v573
        %1041 = vmatmul.mubr.bf16.gmra.mxu0 %v572
        %v1042 = vpop.f32.mrf.mxu0
        %v1043 = vadd.f32 0.0, %v1042
        %v1044 = vpop.f32.mrf.mxu0
        %v1045 = vadd.f32 0.0, %v1044
        %v1046 = vpop.f32.mrf.mxu0
        %v1047 = vadd.f32 0.0, %v1046
        %v1048 = vpop.f32.mrf.mxu0
        %v1049 = vadd.f32 0.0, %v1048
        %1050 = vmatprep.mubr.bf16.mxu0 %v576
        %1051 = vmatmul.mubr.bf16.gmra.mxu0 %v575
        %v1052 = vpop.f32.mrf.mxu0
        %v1053 = vadd.f32 0.0, %v1052
        %v1054 = vpop.f32.mrf.mxu0
        %v1055 = vadd.f32 0.0, %v1054
        %v1056 = vpop.f32.mrf.mxu0
        %v1057 = vadd.f32 0.0, %v1056
        %v1058 = vpop.f32.mrf.mxu0
        %v1059 = vadd.f32 0.0, %v1058
        %1060 = vdwg.mxu0
        %1061 = vmatprep.subr.bf16.mxu0 0
        %1062 = vmatpush1.bf16.msra.mxu0 0
        %1063 = vmatprep.subr.bf16.mxu0 0
        %1064 = vmatpush1.bf16.msra.mxu0 0
        %1065 = vmatprep.subr.bf16.mxu0 0
        %1066 = vmatpush1.bf16.msra.mxu0 0
        %1067 = vmatprep.subr.bf16.mxu0 0
        %1068 = vmatpush1.bf16.msra.mxu0 0
        %1069 = vmatprep.subr.bf16.mxu0 0
        %1070 = vmatpush1.bf16.msra.mxu0 0
        %1071 = vmatprep.subr.bf16.mxu0 %v866
        %1072 = vmatpush1.bf16.msra.mxu0 %v863
        %1073 = vmatprep.subr.bf16.mxu0 %v773
        %1074 = vmatpush1.bf16.msra.mxu0 %v772
        %1075 = vmatprep.subr.bf16.mxu0 %v771
        %1076 = vmatpush1.bf16.msra.mxu0 %v770
        %1077 = vmatprep.subr.bf16.mxu0 0
        %1078 = vmatpush2.bf16.msra.mxu0 0
        %1079 = vmatprep.subr.bf16.mxu0 0
        %1080 = vmatpush2.bf16.msra.mxu0 0
        %1081 = vmatprep.subr.bf16.mxu0 0
        %1082 = vmatpush2.bf16.msra.mxu0 0
        %1083 = vmatprep.subr.bf16.mxu0 0
        %1084 = vmatpush2.bf16.msra.mxu0 0
        %1085 = vmatprep.subr.bf16.mxu0 0
        %1086 = vmatpush2.bf16.msra.mxu0 0
        %1087 = vmatprep.subr.bf16.mxu0 0
        %1088 = vmatpush2.bf16.msra.mxu0 0
        %1089 = vmatprep.subr.bf16.mxu0 0
        %1090 = vmatpush2.bf16.msra.mxu0 0
        %1091 = vmatprep.subr.bf16.mxu0 0
        %1092 = vmatpush2.bf16.msra.mxu0 0
        %1093 = vmatprep.mubr.bf16.mxu0 0
        %1094 = vmatmul.mubr.bf16.gmra.mxu0 %v814
        %v1095 = vpop.f32.mrf.mxu0
        %v1096 = vadd.f32 %v903, %v1095
        %v1097 = vpop.f32.mrf.mxu0
        %v1098 = vadd.f32 %v905, %v1097
        %v1099 = vpop.f32.mrf.mxu0
        %v1100 = vadd.f32 %v907, %v1099
        %v1101 = vpop.f32.mrf.mxu0
        %v1102 = vadd.f32 %v909, %v1101
        %1103 = vmatprep.mubr.bf16.mxu0 0
        %1104 = vmatmul.mubr.bf16.gmra.mxu0 %v817
        %v1105 = vpop.f32.mrf.mxu0
        %v1106 = vadd.f32 %v913, %v1105
        %v1107 = vpop.f32.mrf.mxu0
        %v1108 = vadd.f32 %v915, %v1107
        %v1109 = vpop.f32.mrf.mxu0
        %v1110 = vadd.f32 %v917, %v1109
        %v1111 = vpop.f32.mrf.mxu0
        %v1112 = vadd.f32 %v919, %v1111
        %1113 = vmatprep.mubr.bf16.mxu0 0
        %1114 = vmatmul.mubr.bf16.gmra.mxu0 %v820
        %v1115 = vpop.f32.mrf.mxu0
        %v1116 = vadd.f32 %v923, %v1115
        %v1117 = vpop.f32.mrf.mxu0
        %v1118 = vadd.f32 %v925, %v1117
        %v1119 = vpop.f32.mrf.mxu0
        %v1120 = vadd.f32 %v927, %v1119
        %v1121 = vpop.f32.mrf.mxu0
        %v1122 = vadd.f32 %v929, %v1121
        %1123 = vmatprep.mubr.bf16.mxu0 0
        %1124 = vmatmul.mubr.bf16.gmra.mxu0 %v823
        %v1125 = vpop.f32.mrf.mxu0
        %v1126 = vadd.f32 %v933, %v1125
        %v1127 = vpop.f32.mrf.mxu0
        %v1128 = vadd.f32 %v935, %v1127
        %v1129 = vpop.f32.mrf.mxu0
        %v1130 = vadd.f32 %v937, %v1129
        %v1131 = vpop.f32.mrf.mxu0
        %v1132 = vadd.f32 %v939, %v1131
        %1133 = vmatprep.mubr.bf16.mxu0 0
        %1134 = vmatmul.mubr.bf16.gmra.mxu0 %v826
        %v1135 = vpop.f32.mrf.mxu0
        %v1136 = vadd.f32 %v943, %v1135
        %v1137 = vpop.f32.mrf.mxu0
        %v1138 = vadd.f32 %v945, %v1137
        %v1139 = vpop.f32.mrf.mxu0
        %v1140 = vadd.f32 %v947, %v1139
        %v1141 = vpop.f32.mrf.mxu0
        %v1142 = vadd.f32 %v949, %v1141
        %1143 = vmatprep.mubr.bf16.mxu0 0
        %1144 = vmatmul.mubr.bf16.gmra.mxu0 %v829
        %v1145 = vpop.f32.mrf.mxu0
        %v1146 = vadd.f32 %v953, %v1145
        %v1147 = vpop.f32.mrf.mxu0
        %v1148 = vadd.f32 %v955, %v1147
        %v1149 = vpop.f32.mrf.mxu0
        %v1150 = vadd.f32 %v957, %v1149
        %v1151 = vpop.f32.mrf.mxu0
        %v1152 = vadd.f32 %v959, %v1151
        %1153 = vmatprep.mubr.bf16.mxu0 0
        %1154 = vmatmul.mubr.bf16.gmra.mxu0 %v832
        %v1155 = vpop.f32.mrf.mxu0
        %v1156 = vadd.f32 %v963, %v1155
        %v1157 = vpop.f32.mrf.mxu0
        %v1158 = vadd.f32 %v965, %v1157
        %v1159 = vpop.f32.mrf.mxu0
        %v1160 = vadd.f32 %v967, %v1159
        %v1161 = vpop.f32.mrf.mxu0
        %v1162 = vadd.f32 %v969, %v1161
        %1163 = vmatprep.mubr.bf16.mxu0 0
        %1164 = vmatmul.mubr.bf16.gmra.mxu0 %v835
        %v1165 = vpop.f32.mrf.mxu0
        %v1166 = vadd.f32 %v973, %v1165
        %v1167 = vpop.f32.mrf.mxu0
        %v1168 = vadd.f32 %v975, %v1167
        %v1169 = vpop.f32.mrf.mxu0
        %v1170 = vadd.f32 %v977, %v1169
        %v1171 = vpop.f32.mrf.mxu0
        %v1172 = vadd.f32 %v979, %v1171
        %1173 = vmatprep.mubr.bf16.mxu0 0
        %1174 = vmatmul.mubr.bf16.gmra.mxu0 %v838
        %v1175 = vpop.f32.mrf.mxu0
        %v1176 = vadd.f32 %v983, %v1175
        %v1177 = vpop.f32.mrf.mxu0
        %v1178 = vadd.f32 %v985, %v1177
        %v1179 = vpop.f32.mrf.mxu0
        %v1180 = vadd.f32 %v987, %v1179
        %v1181 = vpop.f32.mrf.mxu0
        %v1182 = vadd.f32 %v989, %v1181
        %1183 = vmatprep.mubr.bf16.mxu0 0
        %1184 = vmatmul.mubr.bf16.gmra.mxu0 %v841
        %v1185 = vpop.f32.mrf.mxu0
        %v1186 = vadd.f32 %v993, %v1185
        %v1187 = vpop.f32.mrf.mxu0
        %v1188 = vadd.f32 %v995, %v1187
        %v1189 = vpop.f32.mrf.mxu0
        %v1190 = vadd.f32 %v997, %v1189
        %v1191 = vpop.f32.mrf.mxu0
        %v1192 = vadd.f32 %v999, %v1191
        %1193 = vmatprep.mubr.bf16.mxu0 0
        %1194 = vmatmul.mubr.bf16.gmra.mxu0 %v844
        %v1195 = vpop.f32.mrf.mxu0
        %v1196 = vadd.f32 %v1003, %v1195
        %v1197 = vpop.f32.mrf.mxu0
        %v1198 = vadd.f32 %v1005, %v1197
        %v1199 = vpop.f32.mrf.mxu0
        %v1200 = vadd.f32 %v1007, %v1199
        %v1201 = vpop.f32.mrf.mxu0
        %v1202 = vadd.f32 %v1009, %v1201
        %1203 = vmatprep.mubr.bf16.mxu0 0
        %1204 = vmatmul.mubr.bf16.gmra.mxu0 %v847
        %v1205 = vpop.f32.mrf.mxu0
        %v1206 = vadd.f32 %v1013, %v1205
        %v1207 = vpop.f32.mrf.mxu0
        %v1208 = vadd.f32 %v1015, %v1207
        %v1209 = vpop.f32.mrf.mxu0
        %v1210 = vadd.f32 %v1017, %v1209
        %v1211 = vpop.f32.mrf.mxu0
        %v1212 = vadd.f32 %v1019, %v1211
        %1213 = vmatprep.mubr.bf16.mxu0 0
        %1214 = vmatmul.mubr.bf16.gmra.mxu0 %v850
        %v1215 = vpop.f32.mrf.mxu0
        %v1216 = vadd.f32 %v1023, %v1215
        %v1217 = vpop.f32.mrf.mxu0
        %v1218 = vadd.f32 %v1025, %v1217
        %v1219 = vpop.f32.mrf.mxu0
        %v1220 = vadd.f32 %v1027, %v1219
        %v1221 = vpop.f32.mrf.mxu0
        %v1222 = vadd.f32 %v1029, %v1221
        %1223 = vmatprep.mubr.bf16.mxu0 0
        %1224 = vmatmul.mubr.bf16.gmra.mxu0 %v853
        %v1225 = vpop.f32.mrf.mxu0
        %v1226 = vadd.f32 %v1033, %v1225
        %v1227 = vpop.f32.mrf.mxu0
        %v1228 = vadd.f32 %v1035, %v1227
        %v1229 = vpop.f32.mrf.mxu0
        %v1230 = vadd.f32 %v1037, %v1229
        %v1231 = vpop.f32.mrf.mxu0
        %v1232 = vadd.f32 %v1039, %v1231
        %1233 = vmatprep.mubr.bf16.mxu0 0
        %1234 = vmatmul.mubr.bf16.gmra.mxu0 %v856
        %v1235 = vpop.f32.mrf.mxu0
        %v1236 = vadd.f32 %v1043, %v1235
        %v1237 = vpop.f32.mrf.mxu0
        %v1238 = vadd.f32 %v1045, %v1237
        %v1239 = vpop.f32.mrf.mxu0
        %v1240 = vadd.f32 %v1047, %v1239
        %v1241 = vpop.f32.mrf.mxu0
        %v1242 = vadd.f32 %v1049, %v1241
        %1243 = vmatprep.mubr.bf16.mxu0 0
        %1244 = vmatmul.mubr.bf16.gmra.mxu0 %v859
        %v1245 = vpop.f32.mrf.mxu0
        %v1246 = vadd.f32 %v1053, %v1245
        %v1247 = vpop.f32.mrf.mxu0
        %v1248 = vadd.f32 %v1055, %v1247
        %v1249 = vpop.f32.mrf.mxu0
        %v1250 = vadd.f32 %v1057, %v1249
        %v1251 = vpop.f32.mrf.mxu0
        %v1252 = vadd.f32 %v1059, %v1251
        %1253 = vdwg.mxu0
        %v1262 = vunpack.c.l.b16 %v578
        %v1263 = vunpack.c.h.b16 %v578
        %v1264 = vunpack.c.l.b16 %v579
        %v1265 = vunpack.c.h.b16 %v579
        %v1266 = vunpack.c.l.b16 %v580
        %v1267 = vunpack.c.h.b16 %v580
        %v1268 = vunpack.c.l.b16 %v581
        %v1269 = vunpack.c.h.b16 %v581
        %v1270 = vunpack.c.l.b16 %v582
        %v1271 = vunpack.c.h.b16 %v582
        %v1272 = vunpack.c.l.b16 %v583
        %v1273 = vunpack.c.h.b16 %v583
        %v1274 = vunpack.c.l.b16 %v584
        %v1275 = vunpack.c.h.b16 %v584
        %v1276 = vunpack.c.l.b16 %v585
        %v1277 = vunpack.c.h.b16 %v585
        %v1278 = vpack.c.b16 %v1264, %v1262
        %v1279 = vpack.c.b16 %v1265, %v1263
        %v1280 = vpack.c.b16 %v1268, %v1266
        %v1281 = vpack.c.b16 %v1269, %v1267
        %v1282 = vpack.c.b16 %v1272, %v1270
        %v1283 = vpack.c.b16 %v1273, %v1271
        %v1284 = vpack.c.b16 %v1276, %v1274
        %v1285 = vpack.c.b16 %v1277, %v1275
        %vm1294 = vcmask 523264
        %v1296 = vsel %vm1294, %v418, 0
        %v1299 = vsel %vm1294, %v419, 0
        %v1302 = vsel %vm1294, %v420, 0
        %v1305 = vsel %vm1294, %v421, 0
        %v1308 = vsel %vm1294, %v422, 0
        %v1311 = vsel %vm1294, %v423, 0
        %v1314 = vsel %vm1294, %v424, 0
        %v1317 = vsel %vm1294, %v425, 0
        %v1320 = vsel %vm1294, %v426, 0
        %v1323 = vsel %vm1294, %v427, 0
        %v1326 = vsel %vm1294, %v428, 0
        %v1329 = vsel %vm1294, %v429, 0
        %v1332 = vsel %vm1294, %v430, 0
        %v1335 = vsel %vm1294, %v431, 0
        %v1338 = vsel %vm1294, %v432, 0
        %v1341 = vsel %vm1294, %v433, 0
        %1343 = vmatprep.subr.bf16.mxu0 0
        %1344 = vmatpush1.bf16.msra.mxu0 0
        %1345 = vmatprep.subr.bf16.mxu0 0
        %1346 = vmatpush1.bf16.msra.mxu0 0
        %1347 = vmatprep.subr.bf16.mxu0 0
        %1348 = vmatpush1.bf16.msra.mxu0 0
        %1349 = vmatprep.subr.bf16.mxu0 0
        %1350 = vmatpush1.bf16.msra.mxu0 0
        %1351 = vmatprep.subr.bf16.mxu0 %v1285
        %1352 = vmatpush1.bf16.msra.mxu0 %v1284
        %1353 = vmatprep.subr.bf16.mxu0 %v1283
        %1354 = vmatpush1.bf16.msra.mxu0 %v1282
        %1355 = vmatprep.subr.bf16.mxu0 %v1281
        %1356 = vmatpush1.bf16.msra.mxu0 %v1280
        %1357 = vmatprep.subr.bf16.mxu0 %v1279
        %1358 = vmatpush1.bf16.msra.mxu0 %v1278
        %1359 = vmatprep.subr.bf16.mxu0 0
        %1360 = vmatpush2.bf16.msra.mxu0 0
        %1361 = vmatprep.subr.bf16.mxu0 0
        %1362 = vmatpush2.bf16.msra.mxu0 0
        %1363 = vmatprep.subr.bf16.mxu0 0
        %1364 = vmatpush2.bf16.msra.mxu0 0
        %1365 = vmatprep.subr.bf16.mxu0 0
        %1366 = vmatpush2.bf16.msra.mxu0 0
        %1367 = vmatprep.subr.bf16.mxu0 0
        %1368 = vmatpush2.bf16.msra.mxu0 0
        %1369 = vmatprep.subr.bf16.mxu0 0
        %1370 = vmatpush2.bf16.msra.mxu0 0
        %1371 = vmatprep.subr.bf16.mxu0 0
        %1372 = vmatpush2.bf16.msra.mxu0 0
        %1373 = vmatprep.subr.bf16.mxu0 0
        %1374 = vmatpush2.bf16.msra.mxu0 0
        %1375 = vmatprep.mubr.bf16.mxu0 0
        %1376 = vmatmul.mubr.bf16.gmra.mxu0 %v1296
        %v1377 = vpop.f32.mrf.mxu0
        %v1378 = vadd.f32 %v1096, %v1377
        %v1379 = vpop.f32.mrf.mxu0
        %v1380 = vadd.f32 %v1098, %v1379
        %v1381 = vpop.f32.mrf.mxu0
        %v1382 = vadd.f32 %v1100, %v1381
        %v1383 = vpop.f32.mrf.mxu0
        %v1384 = vadd.f32 %v1102, %v1383
        %1385 = vmatprep.mubr.bf16.mxu0 0
        %1386 = vmatmul.mubr.bf16.gmra.mxu0 %v1299
        %v1387 = vpop.f32.mrf.mxu0
        %v1388 = vadd.f32 %v1106, %v1387
        %v1389 = vpop.f32.mrf.mxu0
        %v1390 = vadd.f32 %v1108, %v1389
        %v1391 = vpop.f32.mrf.mxu0
        %v1392 = vadd.f32 %v1110, %v1391
        %v1393 = vpop.f32.mrf.mxu0
        %v1394 = vadd.f32 %v1112, %v1393
        %1395 = vmatprep.mubr.bf16.mxu0 0
        %1396 = vmatmul.mubr.bf16.gmra.mxu0 %v1302
        %v1397 = vpop.f32.mrf.mxu0
        %v1398 = vadd.f32 %v1116, %v1397
        %v1399 = vpop.f32.mrf.mxu0
        %v1400 = vadd.f32 %v1118, %v1399
        %v1401 = vpop.f32.mrf.mxu0
        %v1402 = vadd.f32 %v1120, %v1401
        %v1403 = vpop.f32.mrf.mxu0
        %v1404 = vadd.f32 %v1122, %v1403
        %1405 = vmatprep.mubr.bf16.mxu0 0
        %1406 = vmatmul.mubr.bf16.gmra.mxu0 %v1305
        %v1407 = vpop.f32.mrf.mxu0
        %v1408 = vadd.f32 %v1126, %v1407
        %v1409 = vpop.f32.mrf.mxu0
        %v1410 = vadd.f32 %v1128, %v1409
        %v1411 = vpop.f32.mrf.mxu0
        %v1412 = vadd.f32 %v1130, %v1411
        %v1413 = vpop.f32.mrf.mxu0
        %v1414 = vadd.f32 %v1132, %v1413
        %1415 = vmatprep.mubr.bf16.mxu0 0
        %1416 = vmatmul.mubr.bf16.gmra.mxu0 %v1308
        %v1417 = vpop.f32.mrf.mxu0
        %v1418 = vadd.f32 %v1136, %v1417
        %v1419 = vpop.f32.mrf.mxu0
        %v1420 = vadd.f32 %v1138, %v1419
        %v1421 = vpop.f32.mrf.mxu0
        %v1422 = vadd.f32 %v1140, %v1421
        %v1423 = vpop.f32.mrf.mxu0
        %v1424 = vadd.f32 %v1142, %v1423
        %1425 = vmatprep.mubr.bf16.mxu0 0
        %1426 = vmatmul.mubr.bf16.gmra.mxu0 %v1311
        %v1427 = vpop.f32.mrf.mxu0
        %v1428 = vadd.f32 %v1146, %v1427
        %v1429 = vpop.f32.mrf.mxu0
        %v1430 = vadd.f32 %v1148, %v1429
        %v1431 = vpop.f32.mrf.mxu0
        %v1432 = vadd.f32 %v1150, %v1431
        %v1433 = vpop.f32.mrf.mxu0
        %v1434 = vadd.f32 %v1152, %v1433
        %1435 = vmatprep.mubr.bf16.mxu0 0
        %1436 = vmatmul.mubr.bf16.gmra.mxu0 %v1314
        %v1437 = vpop.f32.mrf.mxu0
        %v1438 = vadd.f32 %v1156, %v1437
        %v1439 = vpop.f32.mrf.mxu0
        %v1440 = vadd.f32 %v1158, %v1439
        %v1441 = vpop.f32.mrf.mxu0
        %v1442 = vadd.f32 %v1160, %v1441
        %v1443 = vpop.f32.mrf.mxu0
        %v1444 = vadd.f32 %v1162, %v1443
        %1445 = vmatprep.mubr.bf16.mxu0 0
        %1446 = vmatmul.mubr.bf16.gmra.mxu0 %v1317
        %v1447 = vpop.f32.mrf.mxu0
        %v1448 = vadd.f32 %v1166, %v1447
        %v1449 = vpop.f32.mrf.mxu0
        %v1450 = vadd.f32 %v1168, %v1449
        %v1451 = vpop.f32.mrf.mxu0
        %v1452 = vadd.f32 %v1170, %v1451
        %v1453 = vpop.f32.mrf.mxu0
        %v1454 = vadd.f32 %v1172, %v1453
        %1455 = vmatprep.mubr.bf16.mxu0 0
        %1456 = vmatmul.mubr.bf16.gmra.mxu0 %v1320
        %v1457 = vpop.f32.mrf.mxu0
        %v1458 = vadd.f32 %v1176, %v1457
        %v1459 = vpop.f32.mrf.mxu0
        %v1460 = vadd.f32 %v1178, %v1459
        %v1461 = vpop.f32.mrf.mxu0
        %v1462 = vadd.f32 %v1180, %v1461
        %v1463 = vpop.f32.mrf.mxu0
        %v1464 = vadd.f32 %v1182, %v1463
        %1465 = vmatprep.mubr.bf16.mxu0 0
        %1466 = vmatmul.mubr.bf16.gmra.mxu0 %v1323
        %v1467 = vpop.f32.mrf.mxu0
        %v1468 = vadd.f32 %v1186, %v1467
        %v1469 = vpop.f32.mrf.mxu0
        %v1470 = vadd.f32 %v1188, %v1469
        %v1471 = vpop.f32.mrf.mxu0
        %v1472 = vadd.f32 %v1190, %v1471
        %v1473 = vpop.f32.mrf.mxu0
        %v1474 = vadd.f32 %v1192, %v1473
        %1475 = vmatprep.mubr.bf16.mxu0 0
        %1476 = vmatmul.mubr.bf16.gmra.mxu0 %v1326
        %v1477 = vpop.f32.mrf.mxu0
        %v1478 = vadd.f32 %v1196, %v1477
        %v1479 = vpop.f32.mrf.mxu0
        %v1480 = vadd.f32 %v1198, %v1479
        %v1481 = vpop.f32.mrf.mxu0
        %v1482 = vadd.f32 %v1200, %v1481
        %v1483 = vpop.f32.mrf.mxu0
        %v1484 = vadd.f32 %v1202, %v1483
        %1485 = vmatprep.mubr.bf16.mxu0 0
        %1486 = vmatmul.mubr.bf16.gmra.mxu0 %v1329
        %v1487 = vpop.f32.mrf.mxu0
        %v1488 = vadd.f32 %v1206, %v1487
        %v1489 = vpop.f32.mrf.mxu0
        %v1490 = vadd.f32 %v1208, %v1489
        %v1491 = vpop.f32.mrf.mxu0
        %v1492 = vadd.f32 %v1210, %v1491
        %v1493 = vpop.f32.mrf.mxu0
        %v1494 = vadd.f32 %v1212, %v1493
        %1495 = vmatprep.mubr.bf16.mxu0 0
        %1496 = vmatmul.mubr.bf16.gmra.mxu0 %v1332
        %v1497 = vpop.f32.mrf.mxu0
        %v1498 = vadd.f32 %v1216, %v1497
        %v1499 = vpop.f32.mrf.mxu0
        %v1500 = vadd.f32 %v1218, %v1499
        %v1501 = vpop.f32.mrf.mxu0
        %v1502 = vadd.f32 %v1220, %v1501
        %v1503 = vpop.f32.mrf.mxu0
        %v1504 = vadd.f32 %v1222, %v1503
        %1505 = vmatprep.mubr.bf16.mxu0 0
        %1506 = vmatmul.mubr.bf16.gmra.mxu0 %v1335
        %v1507 = vpop.f32.mrf.mxu0
        %v1508 = vadd.f32 %v1226, %v1507
        %v1509 = vpop.f32.mrf.mxu0
        %v1510 = vadd.f32 %v1228, %v1509
        %v1511 = vpop.f32.mrf.mxu0
        %v1512 = vadd.f32 %v1230, %v1511
        %v1513 = vpop.f32.mrf.mxu0
        %v1514 = vadd.f32 %v1232, %v1513
        %1515 = vmatprep.mubr.bf16.mxu0 0
        %1516 = vmatmul.mubr.bf16.gmra.mxu0 %v1338
        %v1517 = vpop.f32.mrf.mxu0
        %v1518 = vadd.f32 %v1236, %v1517
        %v1519 = vpop.f32.mrf.mxu0
        %v1520 = vadd.f32 %v1238, %v1519
        %v1521 = vpop.f32.mrf.mxu0
        %v1522 = vadd.f32 %v1240, %v1521
        %v1523 = vpop.f32.mrf.mxu0
        %v1524 = vadd.f32 %v1242, %v1523
        %1525 = vmatprep.mubr.bf16.mxu0 0
        %1526 = vmatmul.mubr.bf16.gmra.mxu0 %v1341
        %v1527 = vpop.f32.mrf.mxu0
        %v1528 = vadd.f32 %v1246, %v1527
        %v1529 = vpop.f32.mrf.mxu0
        %v1530 = vadd.f32 %v1248, %v1529
        %v1531 = vpop.f32.mrf.mxu0
        %v1532 = vadd.f32 %v1250, %v1531
        %v1533 = vpop.f32.mrf.mxu0
        %v1534 = vadd.f32 %v1252, %v1533
        %1535 = vdwg.mxu0
        %v1537 = vlaneseq
        %v1538 = vshrl.u32 %v1537, 7
        %v1539 = vsub.s32 0, %v1538
        %v1540 = vrot.slane %v382, %v1539
        %v1541 = vlaneseq
        %v1542 = vshrl.u32 %v1541, 7
        %v1543 = vsub.s32 1, %v1542
        %v1544 = vrot.slane %v382, %v1543
        %v1547 = vadd.f32 %v1378, %v1540
        %v1548 = vadd.f32 %v1380, %v1544
        %v1549 = vadd.f32 %v1382, %v1540
        %v1550 = vadd.f32 %v1384, %v1544
        %v1551 = vadd.f32 %v1388, %v1540
        %v1552 = vadd.f32 %v1390, %v1544
        %v1553 = vadd.f32 %v1392, %v1540
        %v1554 = vadd.f32 %v1394, %v1544
        %v1555 = vadd.f32 %v1398, %v1540
        %v1556 = vadd.f32 %v1400, %v1544
        %v1557 = vadd.f32 %v1402, %v1540
        %v1558 = vadd.f32 %v1404, %v1544
        %v1559 = vadd.f32 %v1408, %v1540
        %v1560 = vadd.f32 %v1410, %v1544
        %v1561 = vadd.f32 %v1412, %v1540
        %v1562 = vadd.f32 %v1414, %v1544
        %v1563 = vadd.f32 %v1418, %v1540
        %v1564 = vadd.f32 %v1420, %v1544
        %v1565 = vadd.f32 %v1422, %v1540
        %v1566 = vadd.f32 %v1424, %v1544
        %v1567 = vadd.f32 %v1428, %v1540
        %v1568 = vadd.f32 %v1430, %v1544
        %v1569 = vadd.f32 %v1432, %v1540
        %v1570 = vadd.f32 %v1434, %v1544
        %v1571 = vadd.f32 %v1438, %v1540
        %v1572 = vadd.f32 %v1440, %v1544
        %v1573 = vadd.f32 %v1442, %v1540
        %v1574 = vadd.f32 %v1444, %v1544
        %v1575 = vadd.f32 %v1448, %v1540
        %v1576 = vadd.f32 %v1450, %v1544
        %v1577 = vadd.f32 %v1452, %v1540
        %v1578 = vadd.f32 %v1454, %v1544
        %v1579 = vadd.f32 %v1458, %v1540
        %v1580 = vadd.f32 %v1460, %v1544
        %v1581 = vadd.f32 %v1462, %v1540
        %v1582 = vadd.f32 %v1464, %v1544
        %v1583 = vadd.f32 %v1468, %v1540
        %v1584 = vadd.f32 %v1470, %v1544
        %v1585 = vadd.f32 %v1472, %v1540
        %v1586 = vadd.f32 %v1474, %v1544
        %v1587 = vadd.f32 %v1478, %v1540
        %v1588 = vadd.f32 %v1480, %v1544
        %v1589 = vadd.f32 %v1482, %v1540
        %v1590 = vadd.f32 %v1484, %v1544
        %v1591 = vadd.f32 %v1488, %v1540
        %v1592 = vadd.f32 %v1490, %v1544
        %v1593 = vadd.f32 %v1492, %v1540
        %v1594 = vadd.f32 %v1494, %v1544
        %v1595 = vadd.f32 %v1498, %v1540
        %v1596 = vadd.f32 %v1500, %v1544
        %v1597 = vadd.f32 %v1502, %v1540
        %v1598 = vadd.f32 %v1504, %v1544
        %v1599 = vadd.f32 %v1508, %v1540
        %v1600 = vadd.f32 %v1510, %v1544
        %v1601 = vadd.f32 %v1512, %v1540
        %v1602 = vadd.f32 %v1514, %v1544
        %v1603 = vadd.f32 %v1518, %v1540
        %v1604 = vadd.f32 %v1520, %v1544
        %v1605 = vadd.f32 %v1522, %v1540
        %v1606 = vadd.f32 %v1524, %v1544
        %v1607 = vadd.f32 %v1528, %v1540
        %v1608 = vadd.f32 %v1530, %v1544
        %v1609 = vadd.f32 %v1532, %v1540
        %v1610 = vadd.f32 %v1534, %v1544
        %vm1611 = vcmp.gt.f32.partialorder %v1547, 0.0
        %vm1612 = vcmp.gt.f32.partialorder %v1548, 0.0
        %vm1613 = vcmp.gt.f32.partialorder %v1549, 0.0
        %vm1614 = vcmp.gt.f32.partialorder %v1550, 0.0
        %vm1615 = vcmp.gt.f32.partialorder %v1551, 0.0
        %vm1616 = vcmp.gt.f32.partialorder %v1552, 0.0
        %vm1617 = vcmp.gt.f32.partialorder %v1553, 0.0
        %vm1618 = vcmp.gt.f32.partialorder %v1554, 0.0
        %vm1619 = vcmp.gt.f32.partialorder %v1555, 0.0
        %vm1620 = vcmp.gt.f32.partialorder %v1556, 0.0
        %vm1621 = vcmp.gt.f32.partialorder %v1557, 0.0
        %vm1622 = vcmp.gt.f32.partialorder %v1558, 0.0
        %vm1623 = vcmp.gt.f32.partialorder %v1559, 0.0
        %vm1624 = vcmp.gt.f32.partialorder %v1560, 0.0
        %vm1625 = vcmp.gt.f32.partialorder %v1561, 0.0
        %vm1626 = vcmp.gt.f32.partialorder %v1562, 0.0
        %vm1627 = vcmp.gt.f32.partialorder %v1563, 0.0
        %vm1628 = vcmp.gt.f32.partialorder %v1564, 0.0
        %vm1629 = vcmp.gt.f32.partialorder %v1565, 0.0
        %vm1630 = vcmp.gt.f32.partialorder %v1566, 0.0
        %vm1631 = vcmp.gt.f32.partialorder %v1567, 0.0
        %vm1632 = vcmp.gt.f32.partialorder %v1568, 0.0
        %vm1633 = vcmp.gt.f32.partialorder %v1569, 0.0
        %vm1634 = vcmp.gt.f32.partialorder %v1570, 0.0
        %vm1635 = vcmp.gt.f32.partialorder %v1571, 0.0
        %vm1636 = vcmp.gt.f32.partialorder %v1572, 0.0
        %vm1637 = vcmp.gt.f32.partialorder %v1573, 0.0
        %vm1638 = vcmp.gt.f32.partialorder %v1574, 0.0
        %vm1639 = vcmp.gt.f32.partialorder %v1575, 0.0
        %vm1640 = vcmp.gt.f32.partialorder %v1576, 0.0
        %vm1641 = vcmp.gt.f32.partialorder %v1577, 0.0
        %vm1642 = vcmp.gt.f32.partialorder %v1578, 0.0
        %vm1643 = vcmp.gt.f32.partialorder %v1579, 0.0
        %vm1644 = vcmp.gt.f32.partialorder %v1580, 0.0
        %vm1645 = vcmp.gt.f32.partialorder %v1581, 0.0
        %vm1646 = vcmp.gt.f32.partialorder %v1582, 0.0
        %vm1647 = vcmp.gt.f32.partialorder %v1583, 0.0
        %vm1648 = vcmp.gt.f32.partialorder %v1584, 0.0
        %vm1649 = vcmp.gt.f32.partialorder %v1585, 0.0
        %vm1650 = vcmp.gt.f32.partialorder %v1586, 0.0
        %vm1651 = vcmp.gt.f32.partialorder %v1587, 0.0
        %vm1652 = vcmp.gt.f32.partialorder %v1588, 0.0
        %vm1653 = vcmp.gt.f32.partialorder %v1589, 0.0
        %vm1654 = vcmp.gt.f32.partialorder %v1590, 0.0
        %vm1655 = vcmp.gt.f32.partialorder %v1591, 0.0
        %vm1656 = vcmp.gt.f32.partialorder %v1592, 0.0
        %vm1657 = vcmp.gt.f32.partialorder %v1593, 0.0
        %vm1658 = vcmp.gt.f32.partialorder %v1594, 0.0
        %vm1659 = vcmp.gt.f32.partialorder %v1595, 0.0
        %vm1660 = vcmp.gt.f32.partialorder %v1596, 0.0
        %vm1661 = vcmp.gt.f32.partialorder %v1597, 0.0
        %vm1662 = vcmp.gt.f32.partialorder %v1598, 0.0
        %vm1663 = vcmp.gt.f32.partialorder %v1599, 0.0
        %vm1664 = vcmp.gt.f32.partialorder %v1600, 0.0
        %vm1665 = vcmp.gt.f32.partialorder %v1601, 0.0
        %vm1666 = vcmp.gt.f32.partialorder %v1602, 0.0
        %vm1667 = vcmp.gt.f32.partialorder %v1603, 0.0
        %vm1668 = vcmp.gt.f32.partialorder %v1604, 0.0
        %vm1669 = vcmp.gt.f32.partialorder %v1605, 0.0
        %vm1670 = vcmp.gt.f32.partialorder %v1606, 0.0
        %vm1671 = vcmp.gt.f32.partialorder %v1607, 0.0
        %vm1672 = vcmp.gt.f32.partialorder %v1608, 0.0
        %vm1673 = vcmp.gt.f32.partialorder %v1609, 0.0
        %vm1674 = vcmp.gt.f32.partialorder %v1610, 0.0
        %v1675 = vmul.f32 %v1547, 0.2
        %v1676 = vmul.f32 %v1548, 0.2
        %v1677 = vmul.f32 %v1549, 0.2
        %v1678 = vmul.f32 %v1550, 0.2
        %v1679 = vmul.f32 %v1551, 0.2
        %v1680 = vmul.f32 %v1552, 0.2
        %v1681 = vmul.f32 %v1553, 0.2
        %v1682 = vmul.f32 %v1554, 0.2
        %v1683 = vmul.f32 %v1555, 0.2
        %v1684 = vmul.f32 %v1556, 0.2
        %v1685 = vmul.f32 %v1557, 0.2
        %v1686 = vmul.f32 %v1558, 0.2
        %v1687 = vmul.f32 %v1559, 0.2
        %v1688 = vmul.f32 %v1560, 0.2
        %v1689 = vmul.f32 %v1561, 0.2
        %v1690 = vmul.f32 %v1562, 0.2
        %v1691 = vmul.f32 %v1563, 0.2
        %v1692 = vmul.f32 %v1564, 0.2
        %v1693 = vmul.f32 %v1565, 0.2
        %v1694 = vmul.f32 %v1566, 0.2
        %v1695 = vmul.f32 %v1567, 0.2
        %v1696 = vmul.f32 %v1568, 0.2
        %v1697 = vmul.f32 %v1569, 0.2
        %v1698 = vmul.f32 %v1570, 0.2
        %v1699 = vmul.f32 %v1571, 0.2
        %v1700 = vmul.f32 %v1572, 0.2
        %v1701 = vmul.f32 %v1573, 0.2
        %v1702 = vmul.f32 %v1574, 0.2
        %v1703 = vmul.f32 %v1575, 0.2
        %v1704 = vmul.f32 %v1576, 0.2
        %v1705 = vmul.f32 %v1577, 0.2
        %v1706 = vmul.f32 %v1578, 0.2
        %v1707 = vmul.f32 %v1579, 0.2
        %v1708 = vmul.f32 %v1580, 0.2
        %v1709 = vmul.f32 %v1581, 0.2
        %v1710 = vmul.f32 %v1582, 0.2
        %v1711 = vmul.f32 %v1583, 0.2
        %v1712 = vmul.f32 %v1584, 0.2
        %v1713 = vmul.f32 %v1585, 0.2
        %v1714 = vmul.f32 %v1586, 0.2
        %v1715 = vmul.f32 %v1587, 0.2
        %v1716 = vmul.f32 %v1588, 0.2
        %v1717 = vmul.f32 %v1589, 0.2
        %v1718 = vmul.f32 %v1590, 0.2
        %v1719 = vmul.f32 %v1591, 0.2
        %v1720 = vmul.f32 %v1592, 0.2
        %v1721 = vmul.f32 %v1593, 0.2
        %v1722 = vmul.f32 %v1594, 0.2
        %v1723 = vmul.f32 %v1595, 0.2
        %v1724 = vmul.f32 %v1596, 0.2
        %v1725 = vmul.f32 %v1597, 0.2
        %v1726 = vmul.f32 %v1598, 0.2
        %v1727 = vmul.f32 %v1599, 0.2
        %v1728 = vmul.f32 %v1600, 0.2
        %v1729 = vmul.f32 %v1601, 0.2
        %v1730 = vmul.f32 %v1602, 0.2
        %v1731 = vmul.f32 %v1603, 0.2
        %v1732 = vmul.f32 %v1604, 0.2
        %v1733 = vmul.f32 %v1605, 0.2
        %v1734 = vmul.f32 %v1606, 0.2
        %v1735 = vmul.f32 %v1607, 0.2
        %v1736 = vmul.f32 %v1608, 0.2
        %v1737 = vmul.f32 %v1609, 0.2
        %v1738 = vmul.f32 %v1610, 0.2
        %v1739 = vsel %vm1611, %v1547, %v1675
        %v1740 = vsel %vm1612, %v1548, %v1676
        %v1741 = vsel %vm1613, %v1549, %v1677
        %v1742 = vsel %vm1614, %v1550, %v1678
        %v1743 = vsel %vm1615, %v1551, %v1679
        %v1744 = vsel %vm1616, %v1552, %v1680
        %v1745 = vsel %vm1617, %v1553, %v1681
        %v1746 = vsel %vm1618, %v1554, %v1682
        %v1747 = vsel %vm1619, %v1555, %v1683
        %v1748 = vsel %vm1620, %v1556, %v1684
        %v1749 = vsel %vm1621, %v1557, %v1685
        %v1750 = vsel %vm1622, %v1558, %v1686
        %v1751 = vsel %vm1623, %v1559, %v1687
        %v1752 = vsel %vm1624, %v1560, %v1688
        %v1753 = vsel %vm1625, %v1561, %v1689
        %v1754 = vsel %vm1626, %v1562, %v1690
        %v1755 = vsel %vm1627, %v1563, %v1691
        %v1756 = vsel %vm1628, %v1564, %v1692
        %v1757 = vsel %vm1629, %v1565, %v1693
        %v1758 = vsel %vm1630, %v1566, %v1694
        %v1759 = vsel %vm1631, %v1567, %v1695
        %v1760 = vsel %vm1632, %v1568, %v1696
        %v1761 = vsel %vm1633, %v1569, %v1697
        %v1762 = vsel %vm1634, %v1570, %v1698
        %v1763 = vsel %vm1635, %v1571, %v1699
        %v1764 = vsel %vm1636, %v1572, %v1700
        %v1765 = vsel %vm1637, %v1573, %v1701
        %v1766 = vsel %vm1638, %v1574, %v1702
        %v1767 = vsel %vm1639, %v1575, %v1703
        %v1768 = vsel %vm1640, %v1576, %v1704
        %v1769 = vsel %vm1641, %v1577, %v1705
        %v1770 = vsel %vm1642, %v1578, %v1706
        %v1771 = vsel %vm1643, %v1579, %v1707
        %v1772 = vsel %vm1644, %v1580, %v1708
        %v1773 = vsel %vm1645, %v1581, %v1709
        %v1774 = vsel %vm1646, %v1582, %v1710
        %v1775 = vsel %vm1647, %v1583, %v1711
        %v1776 = vsel %vm1648, %v1584, %v1712
        %v1777 = vsel %vm1649, %v1585, %v1713
        %v1778 = vsel %vm1650, %v1586, %v1714
        %v1779 = vsel %vm1651, %v1587, %v1715
        %v1780 = vsel %vm1652, %v1588, %v1716
        %v1781 = vsel %vm1653, %v1589, %v1717
        %v1782 = vsel %vm1654, %v1590, %v1718
        %v1783 = vsel %vm1655, %v1591, %v1719
        %v1784 = vsel %vm1656, %v1592, %v1720
        %v1785 = vsel %vm1657, %v1593, %v1721
        %v1786 = vsel %vm1658, %v1594, %v1722
        %v1787 = vsel %vm1659, %v1595, %v1723
        %v1788 = vsel %vm1660, %v1596, %v1724
        %v1789 = vsel %vm1661, %v1597, %v1725
        %v1790 = vsel %vm1662, %v1598, %v1726
        %v1791 = vsel %vm1663, %v1599, %v1727
        %v1792 = vsel %vm1664, %v1600, %v1728
        %v1793 = vsel %vm1665, %v1601, %v1729
        %v1794 = vsel %vm1666, %v1602, %v1730
        %v1795 = vsel %vm1667, %v1603, %v1731
        %v1796 = vsel %vm1668, %v1604, %v1732
        %v1797 = vsel %vm1669, %v1605, %v1733
        %v1798 = vsel %vm1670, %v1606, %v1734
        %v1799 = vsel %vm1671, %v1607, %v1735
        %v1800 = vsel %vm1672, %v1608, %v1736
        %v1801 = vsel %vm1673, %v1609, %v1737
        %v1802 = vsel %vm1674, %v1610, %v1738
        %v1803 = vpack.c.bf16 %v1741, %v1739
        %v1804 = vpack.c.bf16 %v1742, %v1740
        %v1805 = vpack.c.bf16 %v1745, %v1743
        %v1806 = vpack.c.bf16 %v1746, %v1744
        %v1807 = vpack.c.bf16 %v1749, %v1747
        %v1808 = vpack.c.bf16 %v1750, %v1748
        %v1809 = vpack.c.bf16 %v1753, %v1751
        %v1810 = vpack.c.bf16 %v1754, %v1752
        %v1811 = vpack.c.bf16 %v1757, %v1755
        %v1812 = vpack.c.bf16 %v1758, %v1756
        %v1813 = vpack.c.bf16 %v1761, %v1759
        %v1814 = vpack.c.bf16 %v1762, %v1760
        %v1815 = vpack.c.bf16 %v1765, %v1763
        %v1816 = vpack.c.bf16 %v1766, %v1764
        %v1817 = vpack.c.bf16 %v1769, %v1767
        %v1818 = vpack.c.bf16 %v1770, %v1768
        %v1819 = vpack.c.bf16 %v1773, %v1771
        %v1820 = vpack.c.bf16 %v1774, %v1772
        %v1821 = vpack.c.bf16 %v1777, %v1775
        %v1822 = vpack.c.bf16 %v1778, %v1776
        %v1823 = vpack.c.bf16 %v1781, %v1779
        %v1824 = vpack.c.bf16 %v1782, %v1780
        %v1825 = vpack.c.bf16 %v1785, %v1783
        %v1826 = vpack.c.bf16 %v1786, %v1784
        %v1827 = vpack.c.bf16 %v1789, %v1787
        %v1828 = vpack.c.bf16 %v1790, %v1788
        %v1829 = vpack.c.bf16 %v1793, %v1791
        %v1830 = vpack.c.bf16 %v1794, %v1792
        %v1831 = vpack.c.bf16 %v1797, %v1795
        %v1832 = vpack.c.bf16 %v1798, %v1796
        %v1833 = vpack.c.bf16 %v1801, %v1799
        %v1834 = vpack.c.bf16 %v1802, %v1800
        %v1835 = vld [vmem:[%s4] sm:$0xf]
        %v1836 = vld [vmem:[%s4 + $0x4] sm:$0xf]
        %v1837 = vld [vmem:[%s4 + $0x8] sm:$0xf]
        %v1838 = vld [vmem:[%s4 + $0xc] sm:$0xf]
        %v1839 = vld [vmem:[%s4 + $0x10] sm:$0xf]
        %v1840 = vld [vmem:[%s4 + $0x14] sm:$0xf]
        %v1841 = vld [vmem:[%s4 + $0x18] sm:$0xf]
        %v1842 = vld [vmem:[%s4 + $0x1c] sm:$0xf]
        %v1843 = vld [vmem:[%s4 + $0x20] sm:$0xf]
        %v1844 = vld [vmem:[%s4 + $0x24] sm:$0xf]
        %v1845 = vld [vmem:[%s4 + $0x28] sm:$0xf]
        %v1846 = vld [vmem:[%s4 + $0x2c] sm:$0xf]
        %v1847 = vld [vmem:[%s4 + $0x30] sm:$0xf]
        %v1848 = vld [vmem:[%s4 + $0x34] sm:$0xf]
        %v1849 = vld [vmem:[%s4 + $0x38] sm:$0xf]
        %v1850 = vld [vmem:[%s4 + $0x3c] sm:$0xf]
        %v1851 = vld [vmem:[%s4 + $0x40] sm:$0x3]
        %v1869 = vunpack.c.l.b16 %v1835
        %v1870 = vunpack.c.l.b16 %v1836
        %v1871 = vunpack.c.l.b16 %v1837
        %v1872 = vunpack.c.l.b16 %v1838
        %v1873 = vunpack.c.l.b16 %v1839
        %v1874 = vunpack.c.l.b16 %v1840
        %v1875 = vunpack.c.l.b16 %v1841
        %v1876 = vunpack.c.l.b16 %v1842
        %v1877 = vunpack.c.l.b16 %v1843
        %v1878 = vunpack.c.l.b16 %v1844
        %v1879 = vunpack.c.l.b16 %v1845
        %v1880 = vunpack.c.l.b16 %v1846
        %v1881 = vunpack.c.l.b16 %v1847
        %v1882 = vunpack.c.l.b16 %v1848
        %v1883 = vunpack.c.l.b16 %v1849
        %v1884 = vunpack.c.l.b16 %v1850
        %v1885 = vunpack.c.l.b16 %v1851
        %v1886 = vpack.c.b16 %v1870, %v1869
        %v1887 = vpack.c.b16 %v1872, %v1871
        %v1888 = vpack.c.b16 %v1874, %v1873
        %v1889 = vpack.c.b16 %v1876, %v1875
        %v1890 = vpack.c.b16 %v1878, %v1877
        %v1891 = vpack.c.b16 %v1880, %v1879
        %v1892 = vpack.c.b16 %v1882, %v1881
        %v1893 = vpack.c.b16 %v1884, %v1883
        %v1894 = vpack.c.b16 %v1885, %v1885
        %vm1903 = vcmask 31744
        %v1905 = vsel %vm1903, %v1804, 0
        %v1908 = vsel %vm1903, %v1806, 0
        %v1911 = vsel %vm1903, %v1808, 0
        %v1914 = vsel %vm1903, %v1810, 0
        %v1917 = vsel %vm1903, %v1812, 0
        %v1920 = vsel %vm1903, %v1814, 0
        %v1923 = vsel %vm1903, %v1816, 0
        %v1926 = vsel %vm1903, %v1818, 0
        %v1929 = vsel %vm1903, %v1820, 0
        %v1932 = vsel %vm1903, %v1822, 0
        %v1935 = vsel %vm1903, %v1824, 0
        %v1938 = vsel %vm1903, %v1826, 0
        %v1941 = vsel %vm1903, %v1828, 0
        %v1944 = vsel %vm1903, %v1830, 0
        %v1947 = vsel %vm1903, %v1832, 0
        %v1950 = vsel %vm1903, %v1834, 0
        %vm1952 = vcmask 1041408
        %v1954 = vsel %vm1952, %v1894, 0
        %1956 = vmatprep.subr.bf16.mxu0 0
        %1957 = vmatpush1.bf16.msra.mxu0 %v1893
        %1958 = vmatprep.subr.bf16.mxu0 0
        %1959 = vmatpush1.bf16.msra.mxu0 %v1892
        %1960 = vmatprep.subr.bf16.mxu0 0
        %1961 = vmatpush1.bf16.msra.mxu0 %v1891
        %1962 = vmatprep.subr.bf16.mxu0 0
        %1963 = vmatpush1.bf16.msra.mxu0 %v1890
        %1964 = vmatprep.subr.bf16.mxu0 0
        %1965 = vmatpush1.bf16.msra.mxu0 %v1889
        %1966 = vmatprep.subr.bf16.mxu0 0
        %1967 = vmatpush1.bf16.msra.mxu0 %v1888
        %1968 = vmatprep.subr.bf16.mxu0 0
        %1969 = vmatpush1.bf16.msra.mxu0 %v1887
        %1970 = vmatprep.subr.bf16.mxu0 0
        %1971 = vmatpush1.bf16.msra.mxu0 %v1886
        %1972 = vmatprep.subr.bf16.mxu0 0
        %1973 = vmatpush2.bf16.msra.mxu0 0
        %1974 = vmatprep.subr.bf16.mxu0 0
        %1975 = vmatpush2.bf16.msra.mxu0 0
        %1976 = vmatprep.subr.bf16.mxu0 0
        %1977 = vmatpush2.bf16.msra.mxu0 0
        %1978 = vmatprep.subr.bf16.mxu0 0
        %1979 = vmatpush2.bf16.msra.mxu0 0
        %1980 = vmatprep.subr.bf16.mxu0 0
        %1981 = vmatpush2.bf16.msra.mxu0 0
        %1982 = vmatprep.subr.bf16.mxu0 0
        %1983 = vmatpush2.bf16.msra.mxu0 0
        %1984 = vmatprep.subr.bf16.mxu0 0
        %1985 = vmatpush2.bf16.msra.mxu0 0
        %1986 = vmatprep.subr.bf16.mxu0 0
        %1987 = vmatpush2.bf16.msra.mxu0 %v1954
        %1988 = vmatprep.mubr.bf16.mxu0 %v1905
        %1989 = vmatmul.mubr.bf16.gmra.mxu0 %v1803
        %v1990 = vpop.f32.mrf.mxu0
        %v1991 = vadd.f32 %v383, %v1990
        %v1992 = vpop.f32.mrf.mxu0
        %v1993 = vpop.f32.mrf.mxu0
        %v1994 = vadd.f32 %v383, %v1993
        %v1995 = vpop.f32.mrf.mxu0
        %1996 = vmatprep.mubr.bf16.mxu0 %v1908
        %1997 = vmatmul.mubr.bf16.gmra.mxu0 %v1805
        %v1998 = vpop.f32.mrf.mxu0
        %v1999 = vadd.f32 %v383, %v1998
        %v2000 = vpop.f32.mrf.mxu0
        %v2001 = vpop.f32.mrf.mxu0
        %v2002 = vadd.f32 %v383, %v2001
        %v2003 = vpop.f32.mrf.mxu0
        %2004 = vmatprep.mubr.bf16.mxu0 %v1911
        %2005 = vmatmul.mubr.bf16.gmra.mxu0 %v1807
        %v2006 = vpop.f32.mrf.mxu0
        %v2007 = vadd.f32 %v383, %v2006
        %v2008 = vpop.f32.mrf.mxu0
        %v2009 = vpop.f32.mrf.mxu0
        %v2010 = vadd.f32 %v383, %v2009
        %v2011 = vpop.f32.mrf.mxu0
        %2012 = vmatprep.mubr.bf16.mxu0 %v1914
        %2013 = vmatmul.mubr.bf16.gmra.mxu0 %v1809
        %v2014 = vpop.f32.mrf.mxu0
        %v2015 = vadd.f32 %v383, %v2014
        %v2016 = vpop.f32.mrf.mxu0
        %v2017 = vpop.f32.mrf.mxu0
        %v2018 = vadd.f32 %v383, %v2017
        %v2019 = vpop.f32.mrf.mxu0
        %2020 = vmatprep.mubr.bf16.mxu0 %v1917
        %2021 = vmatmul.mubr.bf16.gmra.mxu0 %v1811
        %v2022 = vpop.f32.mrf.mxu0
        %v2023 = vadd.f32 %v383, %v2022
        %v2024 = vpop.f32.mrf.mxu0
        %v2025 = vpop.f32.mrf.mxu0
        %v2026 = vadd.f32 %v383, %v2025
        %v2027 = vpop.f32.mrf.mxu0
        %2028 = vmatprep.mubr.bf16.mxu0 %v1920
        %2029 = vmatmul.mubr.bf16.gmra.mxu0 %v1813
        %v2030 = vpop.f32.mrf.mxu0
        %v2031 = vadd.f32 %v383, %v2030
        %v2032 = vpop.f32.mrf.mxu0
        %v2033 = vpop.f32.mrf.mxu0
        %v2034 = vadd.f32 %v383, %v2033
        %v2035 = vpop.f32.mrf.mxu0
        %2036 = vmatprep.mubr.bf16.mxu0 %v1923
        %2037 = vmatmul.mubr.bf16.gmra.mxu0 %v1815
        %v2038 = vpop.f32.mrf.mxu0
        %v2039 = vadd.f32 %v383, %v2038
        %v2040 = vpop.f32.mrf.mxu0
        %v2041 = vpop.f32.mrf.mxu0
        %v2042 = vadd.f32 %v383, %v2041
        %v2043 = vpop.f32.mrf.mxu0
        %2044 = vmatprep.mubr.bf16.mxu0 %v1926
        %2045 = vmatmul.mubr.bf16.gmra.mxu0 %v1817
        %v2046 = vpop.f32.mrf.mxu0
        %v2047 = vadd.f32 %v383, %v2046
        %v2048 = vpop.f32.mrf.mxu0
        %v2049 = vpop.f32.mrf.mxu0
        %v2050 = vadd.f32 %v383, %v2049
        %v2051 = vpop.f32.mrf.mxu0
        %2052 = vmatprep.mubr.bf16.mxu0 %v1929
        %2053 = vmatmul.mubr.bf16.gmra.mxu0 %v1819
        %v2054 = vpop.f32.mrf.mxu0
        %v2055 = vadd.f32 %v383, %v2054
        %v2056 = vpop.f32.mrf.mxu0
        %v2057 = vpop.f32.mrf.mxu0
        %v2058 = vadd.f32 %v383, %v2057
        %v2059 = vpop.f32.mrf.mxu0
        %2060 = vmatprep.mubr.bf16.mxu0 %v1932
        %2061 = vmatmul.mubr.bf16.gmra.mxu0 %v1821
        %v2062 = vpop.f32.mrf.mxu0
        %v2063 = vadd.f32 %v383, %v2062
        %v2064 = vpop.f32.mrf.mxu0
        %v2065 = vpop.f32.mrf.mxu0
        %v2066 = vadd.f32 %v383, %v2065
        %v2067 = vpop.f32.mrf.mxu0
        %2068 = vmatprep.mubr.bf16.mxu0 %v1935
        %2069 = vmatmul.mubr.bf16.gmra.mxu0 %v1823
        %v2070 = vpop.f32.mrf.mxu0
        %v2071 = vadd.f32 %v383, %v2070
        %v2072 = vpop.f32.mrf.mxu0
        %v2073 = vpop.f32.mrf.mxu0
        %v2074 = vadd.f32 %v383, %v2073
        %v2075 = vpop.f32.mrf.mxu0
        %2076 = vmatprep.mubr.bf16.mxu0 %v1938
        %2077 = vmatmul.mubr.bf16.gmra.mxu0 %v1825
        %v2078 = vpop.f32.mrf.mxu0
        %v2079 = vadd.f32 %v383, %v2078
        %v2080 = vpop.f32.mrf.mxu0
        %v2081 = vpop.f32.mrf.mxu0
        %v2082 = vadd.f32 %v383, %v2081
        %v2083 = vpop.f32.mrf.mxu0
        %2084 = vmatprep.mubr.bf16.mxu0 %v1941
        %2085 = vmatmul.mubr.bf16.gmra.mxu0 %v1827
        %v2086 = vpop.f32.mrf.mxu0
        %v2087 = vadd.f32 %v383, %v2086
        %v2088 = vpop.f32.mrf.mxu0
        %v2089 = vpop.f32.mrf.mxu0
        %v2090 = vadd.f32 %v383, %v2089
        %v2091 = vpop.f32.mrf.mxu0
        %2092 = vmatprep.mubr.bf16.mxu0 %v1944
        %2093 = vmatmul.mubr.bf16.gmra.mxu0 %v1829
        %v2094 = vpop.f32.mrf.mxu0
        %v2095 = vadd.f32 %v383, %v2094
        %v2096 = vpop.f32.mrf.mxu0
        %v2097 = vpop.f32.mrf.mxu0
        %v2098 = vadd.f32 %v383, %v2097
        %v2099 = vpop.f32.mrf.mxu0
        %2100 = vmatprep.mubr.bf16.mxu0 %v1947
        %2101 = vmatmul.mubr.bf16.gmra.mxu0 %v1831
        %v2102 = vpop.f32.mrf.mxu0
        %v2103 = vadd.f32 %v383, %v2102
        %v2104 = vpop.f32.mrf.mxu0
        %v2105 = vpop.f32.mrf.mxu0
        %v2106 = vadd.f32 %v383, %v2105
        %v2107 = vpop.f32.mrf.mxu0
        %2108 = vmatprep.mubr.bf16.mxu0 %v1950
        %2109 = vmatmul.mubr.bf16.gmra.mxu0 %v1833
        %v2110 = vpop.f32.mrf.mxu0
        %v2111 = vadd.f32 %v383, %v2110
        %v2112 = vpop.f32.mrf.mxu0
        %v2113 = vpop.f32.mrf.mxu0
        %v2114 = vadd.f32 %v383, %v2113
        %v2115 = vpop.f32.mrf.mxu0
        %2116 = vdwg.mxu0
        %vm2117 = vcmp.gt.f32.partialorder %v1991, 0.0
        %vm2118 = vcmp.gt.f32.partialorder %v1994, 0.0
        %vm2119 = vcmp.gt.f32.partialorder %v1999, 0.0
        %vm2120 = vcmp.gt.f32.partialorder %v2002, 0.0
        %vm2121 = vcmp.gt.f32.partialorder %v2007, 0.0
        %vm2122 = vcmp.gt.f32.partialorder %v2010, 0.0
        %vm2123 = vcmp.gt.f32.partialorder %v2015, 0.0
        %vm2124 = vcmp.gt.f32.partialorder %v2018, 0.0
        %vm2125 = vcmp.gt.f32.partialorder %v2023, 0.0
        %vm2126 = vcmp.gt.f32.partialorder %v2026, 0.0
        %vm2127 = vcmp.gt.f32.partialorder %v2031, 0.0
        %vm2128 = vcmp.gt.f32.partialorder %v2034, 0.0
        %vm2129 = vcmp.gt.f32.partialorder %v2039, 0.0
        %vm2130 = vcmp.gt.f32.partialorder %v2042, 0.0
        %vm2131 = vcmp.gt.f32.partialorder %v2047, 0.0
        %vm2132 = vcmp.gt.f32.partialorder %v2050, 0.0
        %vm2133 = vcmp.gt.f32.partialorder %v2055, 0.0
        %vm2134 = vcmp.gt.f32.partialorder %v2058, 0.0
        %vm2135 = vcmp.gt.f32.partialorder %v2063, 0.0
        %vm2136 = vcmp.gt.f32.partialorder %v2066, 0.0
        %vm2137 = vcmp.gt.f32.partialorder %v2071, 0.0
        %vm2138 = vcmp.gt.f32.partialorder %v2074, 0.0
        %vm2139 = vcmp.gt.f32.partialorder %v2079, 0.0
        %vm2140 = vcmp.gt.f32.partialorder %v2082, 0.0
        %vm2141 = vcmp.gt.f32.partialorder %v2087, 0.0
        %vm2142 = vcmp.gt.f32.partialorder %v2090, 0.0
        %vm2143 = vcmp.gt.f32.partialorder %v2095, 0.0
        %vm2144 = vcmp.gt.f32.partialorder %v2098, 0.0
        %vm2145 = vcmp.gt.f32.partialorder %v2103, 0.0
        %vm2146 = vcmp.gt.f32.partialorder %v2106, 0.0
        %vm2147 = vcmp.gt.f32.partialorder %v2111, 0.0
        %vm2148 = vcmp.gt.f32.partialorder %v2114, 0.0
        %v2149 = vmul.f32 %v1991, 0.2
        %v2150 = vmul.f32 %v1994, 0.2
        %v2151 = vmul.f32 %v1999, 0.2
        %v2152 = vmul.f32 %v2002, 0.2
        %v2153 = vmul.f32 %v2007, 0.2
        %v2154 = vmul.f32 %v2010, 0.2
        %v2155 = vmul.f32 %v2015, 0.2
        %v2156 = vmul.f32 %v2018, 0.2
        %v2157 = vmul.f32 %v2023, 0.2
        %v2158 = vmul.f32 %v2026, 0.2
        %v2159 = vmul.f32 %v2031, 0.2
        %v2160 = vmul.f32 %v2034, 0.2
        %v2161 = vmul.f32 %v2039, 0.2
        %v2162 = vmul.f32 %v2042, 0.2
        %v2163 = vmul.f32 %v2047, 0.2
        %v2164 = vmul.f32 %v2050, 0.2
        %v2165 = vmul.f32 %v2055, 0.2
        %v2166 = vmul.f32 %v2058, 0.2
        %v2167 = vmul.f32 %v2063, 0.2
        %v2168 = vmul.f32 %v2066, 0.2
        %v2169 = vmul.f32 %v2071, 0.2
        %v2170 = vmul.f32 %v2074, 0.2
        %v2171 = vmul.f32 %v2079, 0.2
        %v2172 = vmul.f32 %v2082, 0.2
        %v2173 = vmul.f32 %v2087, 0.2
        %v2174 = vmul.f32 %v2090, 0.2
        %v2175 = vmul.f32 %v2095, 0.2
        %v2176 = vmul.f32 %v2098, 0.2
        %v2177 = vmul.f32 %v2103, 0.2
        %v2178 = vmul.f32 %v2106, 0.2
        %v2179 = vmul.f32 %v2111, 0.2
        %v2180 = vmul.f32 %v2114, 0.2
        %v2181 = vsel %vm2117, %v1991, %v2149
        %v2182 = vsel %vm2118, %v1994, %v2150
        %v2183 = vsel %vm2119, %v1999, %v2151
        %v2184 = vsel %vm2120, %v2002, %v2152
        %v2185 = vsel %vm2121, %v2007, %v2153
        %v2186 = vsel %vm2122, %v2010, %v2154
        %v2187 = vsel %vm2123, %v2015, %v2155
        %v2188 = vsel %vm2124, %v2018, %v2156
        %v2189 = vsel %vm2125, %v2023, %v2157
        %v2190 = vsel %vm2126, %v2026, %v2158
        %v2191 = vsel %vm2127, %v2031, %v2159
        %v2192 = vsel %vm2128, %v2034, %v2160
        %v2193 = vsel %vm2129, %v2039, %v2161
        %v2194 = vsel %vm2130, %v2042, %v2162
        %v2195 = vsel %vm2131, %v2047, %v2163
        %v2196 = vsel %vm2132, %v2050, %v2164
        %v2197 = vsel %vm2133, %v2055, %v2165
        %v2198 = vsel %vm2134, %v2058, %v2166
        %v2199 = vsel %vm2135, %v2063, %v2167
        %v2200 = vsel %vm2136, %v2066, %v2168
        %v2201 = vsel %vm2137, %v2071, %v2169
        %v2202 = vsel %vm2138, %v2074, %v2170
        %v2203 = vsel %vm2139, %v2079, %v2171
        %v2204 = vsel %vm2140, %v2082, %v2172
        %v2205 = vsel %vm2141, %v2087, %v2173
        %v2206 = vsel %vm2142, %v2090, %v2174
        %v2207 = vsel %vm2143, %v2095, %v2175
        %v2208 = vsel %vm2144, %v2098, %v2176
        %v2209 = vsel %vm2145, %v2103, %v2177
        %v2210 = vsel %vm2146, %v2106, %v2178
        %v2211 = vsel %vm2147, %v2111, %v2179
        %v2212 = vsel %vm2148, %v2114, %v2180
        %v2213 = vpack.c.bf16 %v2182, %v2181
        %v2214 = vpack.c.bf16 %v2184, %v2183
        %v2215 = vpack.c.bf16 %v2186, %v2185
        %v2216 = vpack.c.bf16 %v2188, %v2187
        %v2217 = vpack.c.bf16 %v2190, %v2189
        %v2218 = vpack.c.bf16 %v2192, %v2191
        %v2219 = vpack.c.bf16 %v2194, %v2193
        %v2220 = vpack.c.bf16 %v2196, %v2195
        %v2221 = vpack.c.bf16 %v2198, %v2197
        %v2222 = vpack.c.bf16 %v2200, %v2199
        %v2223 = vpack.c.bf16 %v2202, %v2201
        %v2224 = vpack.c.bf16 %v2204, %v2203
        %v2225 = vpack.c.bf16 %v2206, %v2205
        %v2226 = vpack.c.bf16 %v2208, %v2207
        %v2227 = vpack.c.bf16 %v2210, %v2209
        %v2228 = vpack.c.bf16 %v2212, %v2211
        %v2229 = vld [vmem:[%s5] sm:$0xf]
        %v2230 = vld [vmem:[%s5 + $0x4] sm:$0xf]
        %v2231 = vld [vmem:[%s5 + $0x8] sm:$0xf]
        %v2232 = vld [vmem:[%s5 + $0xc] sm:$0xf]
        %v2237 = vunpack.c.l.b16 %v2229
        %v2238 = vunpack.c.l.b16 %v2230
        %v2239 = vunpack.c.l.b16 %v2231
        %v2240 = vunpack.c.l.b16 %v2232
        %v2241 = vpack.c.b16 %v2238, %v2237
        %v2242 = vpack.c.b16 %v2240, %v2239
        %vm2245 = vcmask 261120
        %v2247 = vsel %vm2245, %v2213, 0
        %v2250 = vsel %vm2245, %v2214, 0
        %v2253 = vsel %vm2245, %v2215, 0
        %v2256 = vsel %vm2245, %v2216, 0
        %v2259 = vsel %vm2245, %v2217, 0
        %v2262 = vsel %vm2245, %v2218, 0
        %v2265 = vsel %vm2245, %v2219, 0
        %v2268 = vsel %vm2245, %v2220, 0
        %v2271 = vsel %vm2245, %v2221, 0
        %v2274 = vsel %vm2245, %v2222, 0
        %v2277 = vsel %vm2245, %v2223, 0
        %v2280 = vsel %vm2245, %v2224, 0
        %v2283 = vsel %vm2245, %v2225, 0
        %v2286 = vsel %vm2245, %v2226, 0
        %v2289 = vsel %vm2245, %v2227, 0
        %v2292 = vsel %vm2245, %v2228, 0
        %2294 = vmatprep.subr.bf16.mxu0 0
        %2295 = vmatpush1.bf16.msra.mxu0 0
        %2296 = vmatprep.subr.bf16.mxu0 0
        %2297 = vmatpush1.bf16.msra.mxu0 0
        %2298 = vmatprep.subr.bf16.mxu0 0
        %2299 = vmatpush1.bf16.msra.mxu0 0
        %2300 = vmatprep.subr.bf16.mxu0 0
        %2301 = vmatpush1.bf16.msra.mxu0 0
        %2302 = vmatprep.subr.bf16.mxu0 0
        %2303 = vmatpush1.bf16.msra.mxu0 0
        %2304 = vmatprep.subr.bf16.mxu0 0
        %2305 = vmatpush1.bf16.msra.mxu0 0
        %2306 = vmatprep.subr.bf16.mxu0 0
        %2307 = vmatpush1.bf16.msra.mxu0 %v2242
        %2308 = vmatprep.subr.bf16.mxu0 0
        %2309 = vmatpush1.bf16.msra.mxu0 %v2241
        %2310 = vmatprep.subr.bf16.mxu0 0
        %2311 = vmatpush2.bf16.msra.mxu0 0
        %2312 = vmatprep.subr.bf16.mxu0 0
        %2313 = vmatpush2.bf16.msra.mxu0 0
        %2314 = vmatprep.subr.bf16.mxu0 0
        %2315 = vmatpush2.bf16.msra.mxu0 0
        %2316 = vmatprep.subr.bf16.mxu0 0
        %2317 = vmatpush2.bf16.msra.mxu0 0
        %2318 = vmatprep.subr.bf16.mxu0 0
        %2319 = vmatpush2.bf16.msra.mxu0 0
        %2320 = vmatprep.subr.bf16.mxu0 0
        %2321 = vmatpush2.bf16.msra.mxu0 0
        %2322 = vmatprep.subr.bf16.mxu0 0
        %2323 = vmatpush2.bf16.msra.mxu0 0
        %2324 = vmatprep.subr.bf16.mxu0 0
        %2325 = vmatpush2.bf16.msra.mxu0 0
        %2326 = vmatprep.mubr.bf16.mxu0 0
        %2327 = vmatmul.mubr.bf16.gmra.mxu0 %v2247
        %v2328 = vpop.f32.mrf.mxu0
        %v2329 = vadd.f32 %v384, %v2328
        %v2330 = vpop.f32.mrf.mxu0
        %v2331 = vpop.f32.mrf.mxu0
        %v2332 = vadd.f32 %v384, %v2331
        %v2333 = vpop.f32.mrf.mxu0
        %2334 = vmatprep.mubr.bf16.mxu0 0
        %2335 = vmatmul.mubr.bf16.gmra.mxu0 %v2250
        %v2336 = vpop.f32.mrf.mxu0
        %v2337 = vadd.f32 %v384, %v2336
        %v2338 = vpop.f32.mrf.mxu0
        %v2339 = vpop.f32.mrf.mxu0
        %v2340 = vadd.f32 %v384, %v2339
        %v2341 = vpop.f32.mrf.mxu0
        %2342 = vmatprep.mubr.bf16.mxu0 0
        %2343 = vmatmul.mubr.bf16.gmra.mxu0 %v2253
        %v2344 = vpop.f32.mrf.mxu0
        %v2345 = vadd.f32 %v384, %v2344
        %v2346 = vpop.f32.mrf.mxu0
        %v2347 = vpop.f32.mrf.mxu0
        %v2348 = vadd.f32 %v384, %v2347
        %v2349 = vpop.f32.mrf.mxu0
        %2350 = vmatprep.mubr.bf16.mxu0 0
        %2351 = vmatmul.mubr.bf16.gmra.mxu0 %v2256
        %v2352 = vpop.f32.mrf.mxu0
        %v2353 = vadd.f32 %v384, %v2352
        %v2354 = vpop.f32.mrf.mxu0
        %v2355 = vpop.f32.mrf.mxu0
        %v2356 = vadd.f32 %v384, %v2355
        %v2357 = vpop.f32.mrf.mxu0
        %2358 = vmatprep.mubr.bf16.mxu0 0
        %2359 = vmatmul.mubr.bf16.gmra.mxu0 %v2259
        %v2360 = vpop.f32.mrf.mxu0
        %v2361 = vadd.f32 %v384, %v2360
        %v2362 = vpop.f32.mrf.mxu0
        %v2363 = vpop.f32.mrf.mxu0
        %v2364 = vadd.f32 %v384, %v2363
        %v2365 = vpop.f32.mrf.mxu0
        %2366 = vmatprep.mubr.bf16.mxu0 0
        %2367 = vmatmul.mubr.bf16.gmra.mxu0 %v2262
        %v2368 = vpop.f32.mrf.mxu0
        %v2369 = vadd.f32 %v384, %v2368
        %v2370 = vpop.f32.mrf.mxu0
        %v2371 = vpop.f32.mrf.mxu0
        %v2372 = vadd.f32 %v384, %v2371
        %v2373 = vpop.f32.mrf.mxu0
        %2374 = vmatprep.mubr.bf16.mxu0 0
        %2375 = vmatmul.mubr.bf16.gmra.mxu0 %v2265
        %v2376 = vpop.f32.mrf.mxu0
        %v2377 = vadd.f32 %v384, %v2376
        %v2378 = vpop.f32.mrf.mxu0
        %v2379 = vpop.f32.mrf.mxu0
        %v2380 = vadd.f32 %v384, %v2379
        %v2381 = vpop.f32.mrf.mxu0
        %2382 = vmatprep.mubr.bf16.mxu0 0
        %2383 = vmatmul.mubr.bf16.gmra.mxu0 %v2268
        %v2384 = vpop.f32.mrf.mxu0
        %v2385 = vadd.f32 %v384, %v2384
        %v2386 = vpop.f32.mrf.mxu0
        %v2387 = vpop.f32.mrf.mxu0
        %v2388 = vadd.f32 %v384, %v2387
        %v2389 = vpop.f32.mrf.mxu0
        %2390 = vmatprep.mubr.bf16.mxu0 0
        %2391 = vmatmul.mubr.bf16.gmra.mxu0 %v2271
        %v2392 = vpop.f32.mrf.mxu0
        %v2393 = vadd.f32 %v384, %v2392
        %v2394 = vpop.f32.mrf.mxu0
        %v2395 = vpop.f32.mrf.mxu0
        %v2396 = vadd.f32 %v384, %v2395
        %v2397 = vpop.f32.mrf.mxu0
        %2398 = vmatprep.mubr.bf16.mxu0 0
        %2399 = vmatmul.mubr.bf16.gmra.mxu0 %v2274
        %v2400 = vpop.f32.mrf.mxu0
        %v2401 = vadd.f32 %v384, %v2400
        %v2402 = vpop.f32.mrf.mxu0
        %v2403 = vpop.f32.mrf.mxu0
        %v2404 = vadd.f32 %v384, %v2403
        %v2405 = vpop.f32.mrf.mxu0
        %2406 = vmatprep.mubr.bf16.mxu0 0
        %2407 = vmatmul.mubr.bf16.gmra.mxu0 %v2277
        %v2408 = vpop.f32.mrf.mxu0
        %v2409 = vadd.f32 %v384, %v2408
        %v2410 = vpop.f32.mrf.mxu0
        %v2411 = vpop.f32.mrf.mxu0
        %v2412 = vadd.f32 %v384, %v2411
        %v2413 = vpop.f32.mrf.mxu0
        %2414 = vmatprep.mubr.bf16.mxu0 0
        %2415 = vmatmul.mubr.bf16.gmra.mxu0 %v2280
        %v2416 = vpop.f32.mrf.mxu0
        %v2417 = vadd.f32 %v384, %v2416
        %v2418 = vpop.f32.mrf.mxu0
        %v2419 = vpop.f32.mrf.mxu0
        %v2420 = vadd.f32 %v384, %v2419
        %v2421 = vpop.f32.mrf.mxu0
        %2422 = vmatprep.mubr.bf16.mxu0 0
        %2423 = vmatmul.mubr.bf16.gmra.mxu0 %v2283
        %v2424 = vpop.f32.mrf.mxu0
        %v2425 = vadd.f32 %v384, %v2424
        %v2426 = vpop.f32.mrf.mxu0
        %v2427 = vpop.f32.mrf.mxu0
        %v2428 = vadd.f32 %v384, %v2427
        %v2429 = vpop.f32.mrf.mxu0
        %2430 = vmatprep.mubr.bf16.mxu0 0
        %2431 = vmatmul.mubr.bf16.gmra.mxu0 %v2286
        %v2432 = vpop.f32.mrf.mxu0
        %v2433 = vadd.f32 %v384, %v2432
        %v2434 = vpop.f32.mrf.mxu0
        %v2435 = vpop.f32.mrf.mxu0
        %v2436 = vadd.f32 %v384, %v2435
        %v2437 = vpop.f32.mrf.mxu0
        %2438 = vmatprep.mubr.bf16.mxu0 0
        %2439 = vmatmul.mubr.bf16.gmra.mxu0 %v2289
        %v2440 = vpop.f32.mrf.mxu0
        %v2441 = vadd.f32 %v384, %v2440
        %v2442 = vpop.f32.mrf.mxu0
        %v2443 = vpop.f32.mrf.mxu0
        %v2444 = vadd.f32 %v384, %v2443
        %v2445 = vpop.f32.mrf.mxu0
        %2446 = vmatprep.mubr.bf16.mxu0 0
        %2447 = vmatmul.mubr.bf16.gmra.mxu0 %v2292
        %v2448 = vpop.f32.mrf.mxu0
        %v2449 = vadd.f32 %v384, %v2448
        %v2450 = vpop.f32.mrf.mxu0
        %v2451 = vpop.f32.mrf.mxu0
        %v2452 = vadd.f32 %v384, %v2451
        %v2453 = vpop.f32.mrf.mxu0
        %2454 = vdwg.mxu0
        %vm2455 = vcmp.gt.f32.partialorder %v2329, 0.0
        %vm2456 = vcmp.gt.f32.partialorder %v2332, 0.0
        %vm2457 = vcmp.gt.f32.partialorder %v2337, 0.0
        %vm2458 = vcmp.gt.f32.partialorder %v2340, 0.0
        %vm2459 = vcmp.gt.f32.partialorder %v2345, 0.0
        %vm2460 = vcmp.gt.f32.partialorder %v2348, 0.0
        %vm2461 = vcmp.gt.f32.partialorder %v2353, 0.0
        %vm2462 = vcmp.gt.f32.partialorder %v2356, 0.0
        %vm2463 = vcmp.gt.f32.partialorder %v2361, 0.0
        %vm2464 = vcmp.gt.f32.partialorder %v2364, 0.0
        %vm2465 = vcmp.gt.f32.partialorder %v2369, 0.0
        %vm2466 = vcmp.gt.f32.partialorder %v2372, 0.0
        %vm2467 = vcmp.gt.f32.partialorder %v2377, 0.0
        %vm2468 = vcmp.gt.f32.partialorder %v2380, 0.0
        %vm2469 = vcmp.gt.f32.partialorder %v2385, 0.0
        %vm2470 = vcmp.gt.f32.partialorder %v2388, 0.0
        %vm2471 = vcmp.gt.f32.partialorder %v2393, 0.0
        %vm2472 = vcmp.gt.f32.partialorder %v2396, 0.0
        %vm2473 = vcmp.gt.f32.partialorder %v2401, 0.0
        %vm2474 = vcmp.gt.f32.partialorder %v2404, 0.0
        %vm2475 = vcmp.gt.f32.partialorder %v2409, 0.0
        %vm2476 = vcmp.gt.f32.partialorder %v2412, 0.0
        %vm2477 = vcmp.gt.f32.partialorder %v2417, 0.0
        %vm2478 = vcmp.gt.f32.partialorder %v2420, 0.0
        %vm2479 = vcmp.gt.f32.partialorder %v2425, 0.0
        %vm2480 = vcmp.gt.f32.partialorder %v2428, 0.0
        %vm2481 = vcmp.gt.f32.partialorder %v2433, 0.0
        %vm2482 = vcmp.gt.f32.partialorder %v2436, 0.0
        %vm2483 = vcmp.gt.f32.partialorder %v2441, 0.0
        %vm2484 = vcmp.gt.f32.partialorder %v2444, 0.0
        %vm2485 = vcmp.gt.f32.partialorder %v2449, 0.0
        %vm2486 = vcmp.gt.f32.partialorder %v2452, 0.0
        %v2487 = vmul.f32 %v2329, 0.2
        %v2488 = vmul.f32 %v2332, 0.2
        %v2489 = vmul.f32 %v2337, 0.2
        %v2490 = vmul.f32 %v2340, 0.2
        %v2491 = vmul.f32 %v2345, 0.2
        %v2492 = vmul.f32 %v2348, 0.2
        %v2493 = vmul.f32 %v2353, 0.2
        %v2494 = vmul.f32 %v2356, 0.2
        %v2495 = vmul.f32 %v2361, 0.2
        %v2496 = vmul.f32 %v2364, 0.2
        %v2497 = vmul.f32 %v2369, 0.2
        %v2498 = vmul.f32 %v2372, 0.2
        %v2499 = vmul.f32 %v2377, 0.2
        %v2500 = vmul.f32 %v2380, 0.2
        %v2501 = vmul.f32 %v2385, 0.2
        %v2502 = vmul.f32 %v2388, 0.2
        %v2503 = vmul.f32 %v2393, 0.2
        %v2504 = vmul.f32 %v2396, 0.2
        %v2505 = vmul.f32 %v2401, 0.2
        %v2506 = vmul.f32 %v2404, 0.2
        %v2507 = vmul.f32 %v2409, 0.2
        %v2508 = vmul.f32 %v2412, 0.2
        %v2509 = vmul.f32 %v2417, 0.2
        %v2510 = vmul.f32 %v2420, 0.2
        %v2511 = vmul.f32 %v2425, 0.2
        %v2512 = vmul.f32 %v2428, 0.2
        %v2513 = vmul.f32 %v2433, 0.2
        %v2514 = vmul.f32 %v2436, 0.2
        %v2515 = vmul.f32 %v2441, 0.2
        %v2516 = vmul.f32 %v2444, 0.2
        %v2517 = vmul.f32 %v2449, 0.2
        %v2518 = vmul.f32 %v2452, 0.2
        %v2519 = vsel %vm2455, %v2329, %v2487
        %v2520 = vsel %vm2456, %v2332, %v2488
        %v2521 = vsel %vm2457, %v2337, %v2489
        %v2522 = vsel %vm2458, %v2340, %v2490
        %v2523 = vsel %vm2459, %v2345, %v2491
        %v2524 = vsel %vm2460, %v2348, %v2492
        %v2525 = vsel %vm2461, %v2353, %v2493
        %v2526 = vsel %vm2462, %v2356, %v2494
        %v2527 = vsel %vm2463, %v2361, %v2495
        %v2528 = vsel %vm2464, %v2364, %v2496
        %v2529 = vsel %vm2465, %v2369, %v2497
        %v2530 = vsel %vm2466, %v2372, %v2498
        %v2531 = vsel %vm2467, %v2377, %v2499
        %v2532 = vsel %vm2468, %v2380, %v2500
        %v2533 = vsel %vm2469, %v2385, %v2501
        %v2534 = vsel %vm2470, %v2388, %v2502
        %v2535 = vsel %vm2471, %v2393, %v2503
        %v2536 = vsel %vm2472, %v2396, %v2504
        %v2537 = vsel %vm2473, %v2401, %v2505
        %v2538 = vsel %vm2474, %v2404, %v2506
        %v2539 = vsel %vm2475, %v2409, %v2507
        %v2540 = vsel %vm2476, %v2412, %v2508
        %v2541 = vsel %vm2477, %v2417, %v2509
        %v2542 = vsel %vm2478, %v2420, %v2510
        %v2543 = vsel %vm2479, %v2425, %v2511
        %v2544 = vsel %vm2480, %v2428, %v2512
        %v2545 = vsel %vm2481, %v2433, %v2513
        %v2546 = vsel %vm2482, %v2436, %v2514
        %v2547 = vsel %vm2483, %v2441, %v2515
        %v2548 = vsel %vm2484, %v2444, %v2516
        %v2549 = vsel %vm2485, %v2449, %v2517
        %v2550 = vsel %vm2486, %v2452, %v2518
        %v2551 = vld [vmem:[%s6] sm:$0x1]
        %v2552 = vpack.c.bf16 %v2520, %v2519
        %v2553 = vpack.c.bf16 %v2522, %v2521
        %v2554 = vpack.c.bf16 %v2524, %v2523
        %v2555 = vpack.c.bf16 %v2526, %v2525
        %v2556 = vpack.c.bf16 %v2528, %v2527
        %v2557 = vpack.c.bf16 %v2530, %v2529
        %v2558 = vpack.c.bf16 %v2532, %v2531
        %v2559 = vpack.c.bf16 %v2534, %v2533
        %v2560 = vpack.c.bf16 %v2536, %v2535
        %v2561 = vpack.c.bf16 %v2538, %v2537
        %v2562 = vpack.c.bf16 %v2540, %v2539
        %v2563 = vpack.c.bf16 %v2542, %v2541
        %v2564 = vpack.c.bf16 %v2544, %v2543
        %v2565 = vpack.c.bf16 %v2546, %v2545
        %v2566 = vpack.c.bf16 %v2548, %v2547
        %v2567 = vpack.c.bf16 %v2550, %v2549
        %2569 = vset.pattern.permute.xlu0 0
        %2570 = vperm.xlu0 %2569, %v385
        %v2571 = vpop.permute.xlu0 %2570
        %v2574 = vsel %vm2245, %v2551, 0
        %v2577 = vsel %vm2245, %v2552, 0
        %v2580 = vsel %vm2245, %v2553, 0
        %v2583 = vsel %vm2245, %v2554, 0
        %v2586 = vsel %vm2245, %v2555, 0
        %v2589 = vsel %vm2245, %v2556, 0
        %v2592 = vsel %vm2245, %v2557, 0
        %v2595 = vsel %vm2245, %v2558, 0
        %v2598 = vsel %vm2245, %v2559, 0
        %v2601 = vsel %vm2245, %v2560, 0
        %v2604 = vsel %vm2245, %v2561, 0
        %v2607 = vsel %vm2245, %v2562, 0
        %v2610 = vsel %vm2245, %v2563, 0
        %v2613 = vsel %vm2245, %v2564, 0
        %v2616 = vsel %vm2245, %v2565, 0
        %v2619 = vsel %vm2245, %v2566, 0
        %v2622 = vsel %vm2245, %v2567, 0
        %2624 = vmatprep.subr.bf16.mxu0 0
        %2625 = vmatpush1.bf16.xpose.msra.mxu0 %v2598
        %2626 = vmatprep.subr.bf16.mxu0 0
        %2627 = vmatpush1.bf16.xpose.msra.mxu0 %v2595
        %2628 = vmatprep.subr.bf16.mxu0 0
        %2629 = vmatpush1.bf16.xpose.msra.mxu0 %v2592
        %2630 = vmatprep.subr.bf16.mxu0 0
        %2631 = vmatpush1.bf16.xpose.msra.mxu0 %v2589
        %2632 = vmatprep.subr.bf16.mxu0 0
        %2633 = vmatpush1.bf16.xpose.msra.mxu0 %v2586
        %2634 = vmatprep.subr.bf16.mxu0 0
        %2635 = vmatpush1.bf16.xpose.msra.mxu0 %v2583
        %2636 = vmatprep.subr.bf16.mxu0 0
        %2637 = vmatpush1.bf16.xpose.msra.mxu0 %v2580
        %2638 = vmatprep.subr.bf16.mxu0 0
        %2639 = vmatpush1.bf16.xpose.msra.mxu0 %v2577
        %2640 = vmatprep.subr.bf16.mxu0 0
        %2641 = vmatpush2.bf16.xpose.msra.mxu0 %v2622
        %2642 = vmatprep.subr.bf16.mxu0 0
        %2643 = vmatpush2.bf16.xpose.msra.mxu0 %v2619
        %2644 = vmatprep.subr.bf16.mxu0 0
        %2645 = vmatpush2.bf16.xpose.msra.mxu0 %v2616
        %2646 = vmatprep.subr.bf16.mxu0 0
        %2647 = vmatpush2.bf16.xpose.msra.mxu0 %v2613
        %2648 = vmatprep.subr.bf16.mxu0 0
        %2649 = vmatpush2.bf16.xpose.msra.mxu0 %v2610
        %2650 = vmatprep.subr.bf16.mxu0 0
        %2651 = vmatpush2.bf16.xpose.msra.mxu0 %v2607
        %2652 = vmatprep.subr.bf16.mxu0 0
        %2653 = vmatpush2.bf16.xpose.msra.mxu0 %v2604
        %2654 = vmatprep.subr.bf16.mxu0 0
        %2655 = vmatpush2.bf16.xpose.msra.mxu0 %v2601
        %2656 = vmatprep.mubr.bf16.mxu0 0
        %2657 = vmatmul.mubr.bf16.gmra.mxu0 %v2574
        %v2658 = vpop.f32.mrf.mxu0
        %v2659 = vadd.f32 %v2571, %v2658
        %v2660 = vpop.f32.mrf.mxu0
        %v2661 = vadd.f32 %v2571, %v2660
        %v2662 = vpop.f32.mrf.mxu0
        %v2663 = vpop.f32.mrf.mxu0
        %2664 = vdwg.mxu0
        %v2665 = vand.u32 2147483647, %v2659
        %v2666 = vand.u32 2147483647, %v2661
        %v2667 = vsub.f32 0.0, %v2665
        %v2668 = vsub.f32 0.0, %v2666
        %v2669 = vmul.f32 %v2667, 1.442695
        %v2670 = vpow.pop %v2669
        %v2671 = vmul.f32 %v2668, 1.442695
        %v2672 = vpow.pop %v2671
        %v2673 = vadd.f32 %v2670, 1.0
        %v2674 = vadd.f32 %v2672, 1.0
        %v2675 = vrcp.pop %v2673
        %v2676 = vmul.f32 1.0, %v2675
        %v2677 = vrcp.pop %v2674
        %v2678 = vmul.f32 1.0, %v2677
        %vm2679 = vcmp.ge.f32.partialorder %v2659, 0.0
        %vm2680 = vcmp.ge.f32.partialorder %v2661, 0.0
        %v2681 = vmul.f32 %v2670, %v2676
        %v2682 = vmul.f32 %v2672, %v2678
        %v2683 = vsel %vm2679, %v2676, %v2681
        %v2684 = vsel %vm2680, %v2678, %v2682
        %v2685 = vmax.f32 %v2683, 1e-07
        %v2686 = vmax.f32 %v2684, 1e-07
        %v2687 = vmin.f32 %v2685, 0.9999999
        %v2688 = vmin.f32 %v2686, 0.9999999
        %v2689 = vlaneseq
        %v2690 = vshrl.u32 %v2689, 7
        %v2691 = vsub.s32 0, %v2690
        %v2692 = vrot.slane %v2687, %v2691
        %v2693 = vlaneseq
        %v2694 = vshrl.u32 %v2693, 7
        %v2695 = vsub.s32 0, %v2694
        %v2696 = vrot.slane %v2688, %v2695
        %2697 = vst [vmem:[%s344] sm:$0xff] %v2692
        %2698 = vst [vmem:[%s344 + $0x8] sm:$0xff] %v2696
        %s2699 = sand.u32 %s208, 1
        %s2700 = scalar_lea.sflag [#allocation3], %s2699
        %s2701 = sand.u32 %s208, 1
        %s2702 = smul.addr %s2701, 16
        %s2703 = scalar_lea.vmem [#allocation2], %s2702
        // Predicated region
        $region53: #{tpu_custom_call.1} parent=51 // pred_check
          %p2704 = pneg %p218
        $region54: #{tpu_custom_call.1} parent=51 // pred_check_branch
          %2706 = sbr.rel (%p2704) target = $region56
        $region55: #{tpu_custom_call.1} parent=51 // pred_region
          %s2707 = smul.u32 2, %s22
          %s2708 = ssub.s32 3, %s2707
          %p2709 = scmp.lt.s32.totalorder %s2708, 2
          %s2710 = scalar_select %p2709, %s2708, 2
          %s2711 = smul.u32 128, %s2710
          %s2713 = ssub.s32 256, %s2711
          %2714 = vsyncadd %s2700, %s2713
          %p2715 = scmp.ne.s32.totalorder 0, %s2711
          %s2716 = smul.addr %s2707, 128
          %s2717 = scalar_lea.hbm %s8, %s2716
          %s2718 = smul.u32 %s2710, 8
          %s2719 = sshll.u32 %s2718, 4
          %s2720 = sshll.u32 %s2703, 4
          %s2721 = int_to_ptr.vmem [resolvable:$true] %s2720
          %2723 = dma.vmem_to_hbm [thread:$0]  (%p2715), %s2721, %s2719, %s2717, %s2700
        $region56: #{tpu_custom_call.1} parent=51 // pred_fallthru
          _
      $region52: #{tpu_custom_call.1} parent=5 // pred_fallthru
        _
      %p2724 = scmp.le.s32.totalorder 2, %s17
      // Predicated region
      $region57: #{tpu_custom_call.1} parent=5 // pred_check
        %p2725 = pneg %p2724
      $region58: #{tpu_custom_call.1} parent=5 // pred_check_branch
        %2727 = sbr.rel (%p2725) target = $region60
      $region59: #{tpu_custom_call.1} parent=5 // pred_region
        %s2728 = ssub.s32 %s17, 2
        // Predicated region
        $region61: #{tpu_custom_call.1} parent=59 // pred_check
          %p2729 = pneg %p224
        $region62: #{tpu_custom_call.1} parent=59 // pred_check_branch
          %2731 = sbr.rel (%p2729) target = $region64
        $region63: #{tpu_custom_call.1} parent=59 // pred_region
          %s2732 = sand.u32 %s209, 1
          %s2733 = scalar_lea.sflag [#allocation3], %s2732
          %s2734 = sand.u32 %s209, 1
          %s2735 = smul.addr %s2734, 16
          %s2736 = scalar_lea.vmem [#allocation2], %s2735
          %2737 = dma.done %s2733, 256
        $region64: #{tpu_custom_call.1} parent=59 // pred_fallthru
          _
      $region60: #{tpu_custom_call.1} parent=5 // pred_fallthru
        _
    $region6: #{tpu_custom_call.1} parent=1 // loop_footer
      %s21 = sadd.s32 1, %s17
    $region7: #{tpu_custom_call.1} parent=1 // loop_footer_branch
      %16 = sbr.rel target = $region3
    $region8: #{tpu_custom_call.1} parent=1 // loop_exit
      _
    %2738 = vsyncpa [#allocation3], 1
    %s2739 = scalar_lea.sflag [#allocation3], 1
    %2740 = vsyncpa %s2739, 1

</llo_original>
